<compile_context>
chip_gen: v5e
topology: v5e:2x2
jax: 0.10.0
libtpu: 0.0.40
codegen_flags: <defaults>
</compile_context>

<pallas_src>
import functools

import jax
import jax.numpy as jnp
from jax.experimental import pallas as pl
from jax.experimental.pallas import tpu as pltpu


def dwconv_kernel(x_ref, w_ref, b_ref, o_ref, *, K):
    # x_ref: (Hp, Wp, TC)  zero-padded input tile (channels-last)
    # w_ref: (K*K, TC)     per-channel taps, channels-last
    # b_ref: (1, TC)       per-channel bias
    # o_ref: (Ho, Wo, TC)  output tile
    Ho, Wo, TC = o_ref.shape

    x = x_ref[...].astype(jnp.float32)            # (Hp, Wp, TC)
    w = w_ref[...].astype(jnp.float32)            # (K*K, TC)

    # Start from the broadcast bias; add K*K shifted, per-channel-scaled slabs.
    acc = jnp.broadcast_to(b_ref[...].astype(jnp.float32)[None], (Ho, Wo, TC))
    for kh in range(K):
        for kw in range(K):
            t = kh * K + kw
            tap = w[t:t + 1][None]                # (1, 1, TC), lane-broadcast
            acc = acc + x[kh:kh + Ho, kw:kw + Wo, :] * tap

    o_ref[...] = acc.astype(o_ref.dtype)


def _pick_channel_tile(C, Hp, Wp, Ho, Wo, itemsize):
    """Largest lane-dense (multiple-of-128) channel tile that keeps the
    double-buffered in+out blocks within a conservative VMEM budget."""
    if C < 128 or C % 128 != 0:
        return C                                   # small C: full extent is legal
    budget = 24 * 1024 * 1024                      # leaves headroom on v7x (64 MiB)
    per_chan = 2 * (Hp * Wp + Ho * Wo) * itemsize  # x2 for double buffering
    tile = 128
    while (tile * 2 <= C and C % (tile * 2) == 0
           and per_chan * (tile * 2) <= budget):
        tile *= 2
    # TODO(synk): for very large feature maps where even a 128-channel tile
    # exceeds VMEM, add halo'd H-tiling (pl.Element blocks) as a second axis.
    return tile


@functools.partial(jax.jit, static_argnames=("stride", "padding"))
def depthwise_conv_forward(x, weight, bias, *, stride=1, padding=1):
    """x: (B, C, H, W); weight: (C, 1, K, K) (PyTorch layout); bias: (C,)."""
    if stride != 1:
        # TODO(synk): strided depthwise conv not implemented (module default is 1).
        raise NotImplementedError("Only stride=1 is supported.")

    B, C, H, W = x.shape
    K = weight.shape[-1]
    Ho = H + 2 * padding - K + 1
    Wo = W + 2 * padding - K + 1
    Hp, Wp = H + 2 * padding, W + 2 * padding

    # NCHW -> NHWC (channels on lanes), zero-pad spatially in the wrapper so
    # the kernel is a pure "valid" conv with no boundary branches.
    x_nhwc = jnp.transpose(x, (0, 2, 3, 1))
    x_pad = jnp.pad(x_nhwc, ((0, 0), (padding, padding), (padding, padding), (0, 0)))

    # (C, 1, K, K) -> (K*K, C): tap index kh*K+kw, channels-last.
    w_taps = weight.reshape(C, K * K).T
    b_row = bias.reshape(1, C)

    TC = _pick_channel_tile(C, Hp, Wp, Ho, Wo, jnp.dtype(x.dtype).itemsize)
    grid = (B, C // TC)

    out_nhwc = pl.pallas_call(
        functools.partial(dwconv_kernel, K=K),
        out_shape=jax.ShapeDtypeStruct((B, Ho, Wo, C), x.dtype),
        grid_spec=pltpu.PrefetchScalarGridSpec(
            num_scalar_prefetch=0,
            grid=grid,
            in_specs=[
                pl.BlockSpec((pl.Squeezed(), Hp, Wp, TC),
                             lambda b, c: (b, 0, 0, c)),
                pl.BlockSpec((K * K, TC), lambda b, c: (0, c)),
                pl.BlockSpec((1, TC), lambda b, c: (0, c)),
            ],
            out_specs=pl.BlockSpec((pl.Squeezed(), Ho, Wo, TC),
                                   lambda b, c: (b, 0, 0, c)),
        ),
        compiler_params=pltpu.CompilerParams(
            dimension_semantics=("parallel", "parallel"),
            vmem_limit_bytes=64 * 1024 * 1024,
        ),
    )(x_pad, w_taps, b_row)

    return jnp.transpose(out_nhwc, (0, 3, 1, 2))   # back to NCHW


def depthwise_conv_reference(x, weight, bias, *, stride=1, padding=1):
    """Pure-JAX reference matching nn.Conv2d(groups=C)."""
    C = x.shape[1]
    out = jax.lax.conv_general_dilated(
        x, weight,
        window_strides=(stride, stride),
        padding=[(padding, padding), (padding, padding)],
        dimension_numbers=("NCHW", "OIHW", "NCHW"),
        feature_group_count=C)
    return out + bias[None, :, None, None]


if __name__ == "__main__":
    # Small shapes consistent with Depthwise_Conv(inner_channels=4)
    B, C, H, W = 2, 4, 16, 16
    K = 3

    key = jax.random.PRNGKey(0)
    kx, kw, kb = jax.random.split(key, 3)

    x = jax.random.normal(kx, (B, C, H, W), dtype=jnp.float32)
    weight = jax.random.normal(kw, (C, 1, K, K), dtype=jnp.float32) * 0.2
    bias = jax.random.normal(kb, (C,), dtype=jnp.float32) * 0.1

    out = jax.block_until_ready(depthwise_conv_forward(x, weight, bias))
    ref = jax.block_until_ready(depthwise_conv_reference(x, weight, bias))

    assert out.shape == (B, C, H, W)
    assert jnp.allclose(out, ref, atol=1e-5, rtol=1e-5), "mismatch vs reference"

    print("KERNEL_OK")
</pallas_src>

<mosaic_0001>
module attributes {stable_mosaic.version = 11 : i64} {
  func.func @dwconv_kernel(%arg0: i32, %arg1: i32, %arg2: memref<1x18x18x4xf32, #tpu.memory_space<vmem>>, %arg3: memref<9x4xf32, #tpu.memory_space<vmem>>, %arg4: memref<1x4xf32, #tpu.memory_space<vmem>>, %arg5: memref<1x16x16x4xf32, #tpu.memory_space<vmem>>) attributes {dimension_semantics = [#tpu.dimension_semantics<parallel>, #tpu.dimension_semantics<parallel>], iteration_bounds = array<i64: 2, 1>, scalar_prefetch = 0 : i64, scratch_operands = 0 : i64, tpu.core_type = #tpu.core_type<tc>, window_params = [{transform_indices = @transform_0, window_bounds = array<i64: 1, 18, 18, 4>}, {transform_indices = @transform_1, window_bounds = array<i64: 9, 4>}, {transform_indices = @transform_2, window_bounds = array<i64: 1, 4>}, {transform_indices = @transform_3, window_bounds = array<i64: 1, 16, 16, 4>}]} {
    %c0 = arith.constant 0 : index
    %c0_0 = arith.constant 0 : index
    %c0_1 = arith.constant 0 : index
    %c0_2 = arith.constant 0 : index
    %0 = vector.load %arg2[%c0, %c0_0, %c0_1, %c0_2] : memref<1x18x18x4xf32, #tpu.memory_space<vmem>>, vector<1x18x18x4xf32>
    %1 = vector.shape_cast %0 : vector<1x18x18x4xf32> to vector<18x18x4xf32>
    %c0_3 = arith.constant 0 : index
    %c0_4 = arith.constant 0 : index
    %2 = vector.load %arg3[%c0_3, %c0_4] : memref<9x4xf32, #tpu.memory_space<vmem>>, vector<9x4xf32>
    %c0_5 = arith.constant 0 : index
    %c0_6 = arith.constant 0 : index
    %3 = vector.load %arg4[%c0_5, %c0_6] : memref<1x4xf32, #tpu.memory_space<vmem>>, vector<1x4xf32>
    %4 = vector.shape_cast %3 : vector<1x4xf32> to vector<1x1x4xf32>
    %5 = vector.shape_cast %4 : vector<1x1x4xf32> to vector<1x1x4xf32>
    %6 = vector.broadcast %5 : vector<1x1x4xf32> to vector<16x16x4xf32>
    %7 = vector.extract_strided_slice %2 {offsets = [0, 0], sizes = [1, 4], strides = [1, 1]} : vector<9x4xf32> to vector<1x4xf32>
    %8 = vector.shape_cast %7 : vector<1x4xf32> to vector<1x1x4xf32>
    %9 = vector.extract_strided_slice %1 {offsets = [0, 0, 0], sizes = [16, 16, 4], strides = [1, 1, 1]} : vector<18x18x4xf32> to vector<16x16x4xf32>
    %10 = vector.broadcast %8 : vector<1x1x4xf32> to vector<16x16x4xf32>
    %11 = arith.mulf %9, %10 : vector<16x16x4xf32>
    %12 = arith.addf %6, %11 : vector<16x16x4xf32>
    %13 = vector.extract_strided_slice %2 {offsets = [1, 0], sizes = [1, 4], strides = [1, 1]} : vector<9x4xf32> to vector<1x4xf32>
    %14 = vector.shape_cast %13 : vector<1x4xf32> to vector<1x1x4xf32>
    %15 = vector.extract_strided_slice %1 {offsets = [0, 1, 0], sizes = [16, 16, 4], strides = [1, 1, 1]} : vector<18x18x4xf32> to vector<16x16x4xf32>
    %16 = vector.broadcast %14 : vector<1x1x4xf32> to vector<16x16x4xf32>
    %17 = arith.mulf %15, %16 : vector<16x16x4xf32>
    %18 = arith.addf %12, %17 : vector<16x16x4xf32>
    %19 = vector.extract_strided_slice %2 {offsets = [2, 0], sizes = [1, 4], strides = [1, 1]} : vector<9x4xf32> to vector<1x4xf32>
    %20 = vector.shape_cast %19 : vector<1x4xf32> to vector<1x1x4xf32>
    %21 = vector.extract_strided_slice %1 {offsets = [0, 2, 0], sizes = [16, 16, 4], strides = [1, 1, 1]} : vector<18x18x4xf32> to vector<16x16x4xf32>
    %22 = vector.broadcast %20 : vector<1x1x4xf32> to vector<16x16x4xf32>
    %23 = arith.mulf %21, %22 : vector<16x16x4xf32>
    %24 = arith.addf %18, %23 : vector<16x16x4xf32>
    %25 = vector.extract_strided_slice %2 {offsets = [3, 0], sizes = [1, 4], strides = [1, 1]} : vector<9x4xf32> to vector<1x4xf32>
    %26 = vector.shape_cast %25 : vector<1x4xf32> to vector<1x1x4xf32>
    %27 = vector.extract_strided_slice %1 {offsets = [1, 0, 0], sizes = [16, 16, 4], strides = [1, 1, 1]} : vector<18x18x4xf32> to vector<16x16x4xf32>
    %28 = vector.broadcast %26 : vector<1x1x4xf32> to vector<16x16x4xf32>
    %29 = arith.mulf %27, %28 : vector<16x16x4xf32>
    %30 = arith.addf %24, %29 : vector<16x16x4xf32>
    %31 = vector.extract_strided_slice %2 {offsets = [4, 0], sizes = [1, 4], strides = [1, 1]} : vector<9x4xf32> to vector<1x4xf32>
    %32 = vector.shape_cast %31 : vector<1x4xf32> to vector<1x1x4xf32>
    %33 = vector.extract_strided_slice %1 {offsets = [1, 1, 0], sizes = [16, 16, 4], strides = [1, 1, 1]} : vector<18x18x4xf32> to vector<16x16x4xf32>
    %34 = vector.broadcast %32 : vector<1x1x4xf32> to vector<16x16x4xf32>
    %35 = arith.mulf %33, %34 : vector<16x16x4xf32>
    %36 = arith.addf %30, %35 : vector<16x16x4xf32>
    %37 = vector.extract_strided_slice %2 {offsets = [5, 0], sizes = [1, 4], strides = [1, 1]} : vector<9x4xf32> to vector<1x4xf32>
    %38 = vector.shape_cast %37 : vector<1x4xf32> to vector<1x1x4xf32>
    %39 = vector.extract_strided_slice %1 {offsets = [1, 2, 0], sizes = [16, 16, 4], strides = [1, 1, 1]} : vector<18x18x4xf32> to vector<16x16x4xf32>
    %40 = vector.broadcast %38 : vector<1x1x4xf32> to vector<16x16x4xf32>
    %41 = arith.mulf %39, %40 : vector<16x16x4xf32>
    %42 = arith.addf %36, %41 : vector<16x16x4xf32>
    %43 = vector.extract_strided_slice %2 {offsets = [6, 0], sizes = [1, 4], strides = [1, 1]} : vector<9x4xf32> to vector<1x4xf32>
    %44 = vector.shape_cast %43 : vector<1x4xf32> to vector<1x1x4xf32>
    %45 = vector.extract_strided_slice %1 {offsets = [2, 0, 0], sizes = [16, 16, 4], strides = [1, 1, 1]} : vector<18x18x4xf32> to vector<16x16x4xf32>
    %46 = vector.broadcast %44 : vector<1x1x4xf32> to vector<16x16x4xf32>
    %47 = arith.mulf %45, %46 : vector<16x16x4xf32>
    %48 = arith.addf %42, %47 : vector<16x16x4xf32>
    %49 = vector.extract_strided_slice %2 {offsets = [7, 0], sizes = [1, 4], strides = [1, 1]} : vector<9x4xf32> to vector<1x4xf32>
    %50 = vector.shape_cast %49 : vector<1x4xf32> to vector<1x1x4xf32>
    %51 = vector.extract_strided_slice %1 {offsets = [2, 1, 0], sizes = [16, 16, 4], strides = [1, 1, 1]} : vector<18x18x4xf32> to vector<16x16x4xf32>
    %52 = vector.broadcast %50 : vector<1x1x4xf32> to vector<16x16x4xf32>
    %53 = arith.mulf %51, %52 : vector<16x16x4xf32>
    %54 = arith.addf %48, %53 : vector<16x16x4xf32>
    %55 = vector.extract_strided_slice %2 {offsets = [8, 0], sizes = [1, 4], strides = [1, 1]} : vector<9x4xf32> to vector<1x4xf32>
    %56 = vector.shape_cast %55 : vector<1x4xf32> to vector<1x1x4xf32>
    %57 = vector.extract_strided_slice %1 {offsets = [2, 2, 0], sizes = [16, 16, 4], strides = [1, 1, 1]} : vector<18x18x4xf32> to vector<16x16x4xf32>
    %58 = vector.broadcast %56 : vector<1x1x4xf32> to vector<16x16x4xf32>
    %59 = arith.mulf %57, %58 : vector<16x16x4xf32>
    %60 = arith.addf %54, %59 : vector<16x16x4xf32>
    %c0_7 = arith.constant 0 : index
    %c0_8 = arith.constant 0 : index
    %c0_9 = arith.constant 0 : index
    %c0_10 = arith.constant 0 : index
    %61 = vector.load %arg5[%c0_7, %c0_8, %c0_9, %c0_10] : memref<1x16x16x4xf32, #tpu.memory_space<vmem>>, vector<1x16x16x4xf32>
    %62 = vector.shape_cast %61 : vector<1x16x16x4xf32> to vector<16x16x4xf32>
    %63 = vector.shape_cast %60 : vector<16x16x4xf32> to vector<1x16x16x4xf32>
    tpu.vector_store %arg5[%c0_7, %c0_8, %c0_9, %c0_10], %63 {strides = array<i32>} : memref<1x16x16x4xf32, #tpu.memory_space<vmem>>, vector<1x16x16x4xf32>,
    return
  }
  func.func @transform_0(%arg0: i32, %arg1: i32) -> (i32, i32, i32, i32) {
    %c0_i32 = arith.constant 0 : i32
    %c0_i32_0 = arith.constant 0 : i32
    %c0_i32_1 = arith.constant 0 : i32
    return %arg0, %c0_i32, %c0_i32_0, %arg1 : i32, i32, i32, i32
  }
  func.func @transform_1(%arg0: i32, %arg1: i32) -> (i32, i32) {
    %c0_i32 = arith.constant 0 : i32
    %c0_i32_0 = arith.constant 0 : i32
    return %c0_i32, %arg1 : i32, i32
  }
  func.func @transform_2(%arg0: i32, %arg1: i32) -> (i32, i32) {
    %c0_i32 = arith.constant 0 : i32
    %c0_i32_0 = arith.constant 0 : i32
    return %c0_i32, %arg1 : i32, i32
  }
  func.func @transform_3(%arg0: i32, %arg1: i32) -> (i32, i32, i32, i32) {
    %c0_i32 = arith.constant 0 : i32
    %c0_i32_0 = arith.constant 0 : i32
    %c0_i32_1 = arith.constant 0 : i32
    return %arg0, %c0_i32, %c0_i32_0, %arg1 : i32, i32, i32, i32
  }
}

</mosaic_0001>

<llo_original>
// kernel: depthwise_conv_forward.1
$region0: #{depthwise_conv_forward.1}
  #allocation0 [shape = 'u32[]', space=smem, size = 0x4, offset = 0x4, fixed_abs, tag = 'smem constant byte address 0x4 - core index']
  #allocation1 [shape = 'u32[72,128]{1,0:T(1,128)}', space=vmem, size = 0x9000, scoped, tag = 'internal scratch']
  %s0 = inlined_call_operand.vmem [shape: f32[2,18,18,4], index: 0, kind: input, shape index: {}]
  %s1 = inlined_call_operand.vmem [shape: f32[9,4], index: 1, kind: input, shape index: {}]
  %s2 = inlined_call_operand.vmem [shape: f32[1,4], index: 2, kind: input, shape index: {}]
  %s3 = inlined_call_operand.vmem [shape: f32[2,16,16,4], index: 3, kind: output, shape index: {}]
  %s4 = sld [smem:[#allocation0]]
  $region45: #{depthwise_conv_forward.1} parent=0
    _
  %s6 = ssub.s32 1, %s4
  %s7 = scalar_select 0, %s6, %s4
  loop: start=0, step=1, limit=4
  $region2: #{depthwise_conv_forward.1} parent=0 // loop_pre_header
    _
  $region3: #{depthwise_conv_forward.1} parent=0 // loop_header
    %s9 = sphi 0, %s13
    %p10 = scmp.ge.s32.totalorder %s9, 4
    %s16 = sphi 0, %s28
    %s17 = sphi 0, %s24
    %s18 = sphi 0, %s16
    %s19 = sphi 0, %s17
    %s20 = sphi 0, %s18
    %s21 = sphi 0, %s19
    %s33 = sphi 0, %s35
    %s36 = sphi 0, %s33
    %s37 = sphi 0, %s36
    %s53 = sphi 0, %s37
    %s59 = sphi 0, %s61
    %s62 = sphi 0, %s59
    %s63 = sphi 0, %s62
    %s79 = sphi 0, %s63
    %s85 = sphi 0, %s87
    %s88 = sphi 0, %s85
    %s89 = sphi 0, %s88
    %s105 = sphi 0, %s89
    %s113 = sphi 0, %s115
    %s116 = sphi 0, %s113
    %s117 = sphi 0, %s116
    %s133 = sphi 0, %s117
  $region4: #{depthwise_conv_forward.1} parent=0 // loop_header_branch
    %12 = sbr.rel (%p10) target = $region8
  $region5: #{depthwise_conv_forward.1} parent=0 // loop_body
    %s14 = ssub.s32 %s9, 1
    %s15 = ssub.s32 %s9, 2
    %s22 = sadd.s32 1, %s17
    %p23 = scmp.ge.s32.totalorder %s22, 1
    %s24 = scalar_select %p23, 0, %s22
    %s25 = sadd.s32 1, %s16
    %s26 = scalar_select %p23, %s25, %s16
    %p27 = scmp.ge.s32.totalorder %s26, 2
    %s28 = scalar_select %p27, 0, %s26
    %s29 = ssub.s32 %s16, %s28
    %s30 = ssub.s32 %s17, %s24
    %s31 = sor.u32 %s29, %s30
    %p32 = scmp.eq.s32.totalorder %s31, 0
    %s34 = sadd.s32 %s33, 1
    %s35 = scalar_select %p32, %s33, %s34
    %p38 = pneg %p32
    %p39 = scmp.eq.s32.totalorder %s9, 1
    %p40 = por %p38, %p39
    %p41 = scmp.ne.s32.totalorder %s33, %s36
    %p42 = scmp.eq.s32.totalorder %s9, 0
    %p43 = por %p41, %p42
    %p44 = scmp.ne.s32.totalorder %s33, %s36
    %p45 = scmp.eq.s32.totalorder %s14, 1
    %p46 = por %p44, %p45
    %p47 = scmp.ne.s32.totalorder %s36, %s37
    %p48 = scmp.eq.s32.totalorder %s14, 0
    %p49 = por %p47, %p48
    %p50 = scmp.ne.s32.totalorder %s36, %s37
    %p51 = scmp.eq.s32.totalorder %s15, 1
    %p52 = por %p50, %p51
    %p54 = scmp.ne.s32.totalorder %s37, %s53
    %p55 = scmp.eq.s32.totalorder %s15, 0
    %p56 = por %p54, %p55
    %s57 = ssub.s32 %s17, %s24
    %p58 = scmp.eq.s32.totalorder %s57, 0
    %s60 = sadd.s32 %s59, 1
    %s61 = scalar_select %p58, %s59, %s60
    %p64 = pneg %p58
    %p65 = scmp.eq.s32.totalorder %s9, 1
    %p66 = por %p64, %p65
    %p67 = scmp.ne.s32.totalorder %s59, %s62
    %p68 = scmp.eq.s32.totalorder %s9, 0
    %p69 = por %p67, %p68
    %p70 = scmp.ne.s32.totalorder %s59, %s62
    %p71 = scmp.eq.s32.totalorder %s14, 1
    %p72 = por %p70, %p71
    %p73 = scmp.ne.s32.totalorder %s62, %s63
    %p74 = scmp.eq.s32.totalorder %s14, 0
    %p75 = por %p73, %p74
    %p76 = scmp.ne.s32.totalorder %s62, %s63
    %p77 = scmp.eq.s32.totalorder %s15, 1
    %p78 = por %p76, %p77
    %p80 = scmp.ne.s32.totalorder %s63, %s79
    %p81 = scmp.eq.s32.totalorder %s15, 0
    %p82 = por %p80, %p81
    %s83 = ssub.s32 %s17, %s24
    %p84 = scmp.eq.s32.totalorder %s83, 0
    %s86 = sadd.s32 %s85, 1
    %s87 = scalar_select %p84, %s85, %s86
    %p90 = pneg %p84
    %p91 = scmp.eq.s32.totalorder %s9, 1
    %p92 = por %p90, %p91
    %p93 = scmp.ne.s32.totalorder %s85, %s88
    %p94 = scmp.eq.s32.totalorder %s9, 0
    %p95 = por %p93, %p94
    %p96 = scmp.ne.s32.totalorder %s85, %s88
    %p97 = scmp.eq.s32.totalorder %s14, 1
    %p98 = por %p96, %p97
    %p99 = scmp.ne.s32.totalorder %s88, %s89
    %p100 = scmp.eq.s32.totalorder %s14, 0
    %p101 = por %p99, %p100
    %p102 = scmp.ne.s32.totalorder %s88, %s89
    %p103 = scmp.eq.s32.totalorder %s15, 1
    %p104 = por %p102, %p103
    %p106 = scmp.ne.s32.totalorder %s89, %s105
    %p107 = scmp.eq.s32.totalorder %s15, 0
    %p108 = por %p106, %p107
    %s109 = ssub.s32 %s16, %s28
    %s110 = ssub.s32 %s17, %s24
    %s111 = sor.u32 %s109, %s110
    %p112 = scmp.eq.s32.totalorder %s111, 0
    %s114 = sadd.s32 %s113, 1
    %s115 = scalar_select %p112, %s113, %s114
    %p118 = pneg %p112
    %p119 = scmp.eq.s32.totalorder %s9, 1
    %p120 = por %p118, %p119
    %p121 = scmp.ne.s32.totalorder %s113, %s116
    %p122 = scmp.eq.s32.totalorder %s9, 0
    %p123 = por %p121, %p122
    %p124 = scmp.ne.s32.totalorder %s113, %s116
    %p125 = scmp.eq.s32.totalorder %s14, 1
    %p126 = por %p124, %p125
    %p127 = scmp.ne.s32.totalorder %s116, %s117
    %p128 = scmp.eq.s32.totalorder %s14, 0
    %p129 = por %p127, %p128
    %p130 = scmp.ne.s32.totalorder %s116, %s117
    %p131 = scmp.eq.s32.totalorder %s15, 1
    %p132 = por %p130, %p131
    %p134 = scmp.ne.s32.totalorder %s117, %s133
    %p135 = scmp.eq.s32.totalorder %s15, 0
    %p136 = por %p134, %p135
    %p137 = scmp.le.s32.totalorder 1, %s9
    %p138 = scmp.lt.s32.totalorder %s9, 3
    %p139 = pnand %p137, %p138
    %p140 = pneg %p139
    // Predicated region
    $region9: #{depthwise_conv_forward.1} parent=5 // pred_check
      _
    $region10: #{depthwise_conv_forward.1} parent=5 // pred_check_branch
      %142 = sbr.rel (%p139) target = $region12
    $region11: #{depthwise_conv_forward.1} parent=5 // pred_region
      %s143 = ssub.s32 %s9, 1
      // Predicated region
      $region13: #{depthwise_conv_forward.1} parent=11 // pred_check
        %p144 = pneg %p75
      $region14: #{depthwise_conv_forward.1} parent=11 // pred_check_branch
        %146 = sbr.rel (%p144) target = $region16
      $region15: #{depthwise_conv_forward.1} parent=11 // pred_region
        %p147 = scmp.lt.s32.totalorder %s19, 0
        %s148 = scalar_select %p147, %s19, 0
        %s149 = smul.addr %s148, 8
        %s150 = scalar_lea.vmem %s1, %s149
      $region16: #{depthwise_conv_forward.1} parent=11 // pred_fallthru
        _
      // Predicated region
      $region17: #{depthwise_conv_forward.1} parent=11 // pred_check
        %p151 = pneg %p101
      $region18: #{depthwise_conv_forward.1} parent=11 // pred_check_branch
        %153 = sbr.rel (%p151) target = $region20
      $region19: #{depthwise_conv_forward.1} parent=11 // pred_region
        %p154 = scmp.lt.s32.totalorder %s19, 0
        %s155 = scalar_select %p154, %s19, 0
        %s156 = scalar_lea.vmem %s2, %s155
      $region20: #{depthwise_conv_forward.1} parent=11 // pred_fallthru
        _
    $region12: #{depthwise_conv_forward.1} parent=5 // pred_fallthru
      _
    %p157 = scmp.lt.s32.totalorder %s9, 2
    // Predicated region
    $region21: #{depthwise_conv_forward.1} parent=5 // pred_check
      %p158 = pneg %p157
    $region22: #{depthwise_conv_forward.1} parent=5 // pred_check_branch
      %160 = sbr.rel (%p158) target = $region24
    $region23: #{depthwise_conv_forward.1} parent=5 // pred_region
      // Predicated region
      $region25: #{depthwise_conv_forward.1} parent=23 // pred_check
        %p161 = pneg %p43
      $region26: #{depthwise_conv_forward.1} parent=23 // pred_check_branch
        %163 = sbr.rel (%p161) target = $region28
      $region27: #{depthwise_conv_forward.1} parent=23 // pred_region
        %p164 = scmp.lt.s32.totalorder %s16, 1
        %s165 = scalar_select %p164, %s16, 1
        %p166 = scmp.lt.s32.totalorder %s17, 0
        %s167 = scalar_select %p166, %s17, 0
        %s168 = smul.addr %s165, 54
        %s169 = sadd.s32 %s167, %s168
        %s170 = smul.addr %s169, 8
        %s171 = scalar_lea.vmem %s0, %s170
      $region28: #{depthwise_conv_forward.1} parent=23 // pred_fallthru
        _
    $region24: #{depthwise_conv_forward.1} parent=5 // pred_fallthru
      _
    %p172 = scmp.le.s32.totalorder 1, %s9
    %p173 = scmp.lt.s32.totalorder %s9, 3
    %p174 = pnand %p172, %p173
    %p175 = pneg %p174
    // Predicated region
    $region29: #{depthwise_conv_forward.1} parent=5 // pred_check
      _
    $region30: #{depthwise_conv_forward.1} parent=5 // pred_check_branch
      %177 = sbr.rel (%p174) target = $region32
    $region31: #{depthwise_conv_forward.1} parent=5 // pred_region
      %s178 = ssub.s32 %s9, 1
      %p179 = scmp.lt.s32.totalorder %s18, 1
      %s180 = scalar_select %p179, %s18, 1
      %p181 = scmp.lt.s32.totalorder %s19, 0
      %s182 = scalar_select %p181, %s19, 0
      %s183 = smul.addr %s180, 54
      %s184 = sadd.s32 %s182, %s183
      %s185 = smul.addr %s184, 8
      %s186 = scalar_lea.vmem %s0, %s185
      %p187 = pneg %p49
      %p188 = pneg %p46
      %p189 = scmp.lt.s32.totalorder %s19, 0
      %s190 = scalar_select %p189, %s19, 0
      %s191 = smul.addr %s190, 8
      %s192 = scalar_lea.vmem %s1, %s191
      %p193 = pneg %p75
      %p194 = pneg %p72
      %p195 = scmp.lt.s32.totalorder %s19, 0
      %s196 = scalar_select %p195, %s19, 0
      %s197 = scalar_lea.vmem %s2, %s196
      %p198 = pneg %p101
      %p199 = pneg %p98
      %p200 = pneg %p129
      %p201 = pneg %p126
      %p202 = scmp.lt.s32.totalorder %s18, 1
      %s203 = scalar_select %p202, %s18, 1
      %p204 = scmp.lt.s32.totalorder %s19, 0
      %s205 = scalar_select %p204, %s19, 0
      %s206 = smul.addr %s203, 32
      %s207 = sadd.s32 %s205, %s206
      %s208 = smul.addr %s207, 8
      %s209 = scalar_lea.vmem %s3, %s208
      %p210 = scmp.lt.s32.totalorder %s18, 1
      %s211 = scalar_select %p210, %s18, 1
      %p212 = scmp.lt.s32.totalorder %s19, 0
      %s213 = scalar_select %p212, %s19, 0
      %s214 = smul.addr %s211, 54
      %s215 = sadd.s32 %s213, %s214
      %s216 = smul.addr %s215, 8
      %s217 = scalar_lea.vmem %s0, %s216
      %p218 = scmp.lt.s32.totalorder %s19, 0
      %s219 = scalar_select %p218, %s19, 0
      %s220 = smul.addr %s219, 8
      %s221 = scalar_lea.vmem %s1, %s220
      %p222 = scmp.lt.s32.totalorder %s19, 0
      %s223 = scalar_select %p222, %s19, 0
      %s224 = scalar_lea.vmem %s2, %s223
      %p225 = scmp.lt.s32.totalorder %s18, 1
      %s226 = scalar_select %p225, %s18, 1
      %p227 = scmp.lt.s32.totalorder %s19, 0
      %s228 = scalar_select %p227, %s19, 0
      %s229 = smul.addr %s226, 32
      %s230 = sadd.s32 %s228, %s229
      %s231 = smul.addr %s230, 8
      %s232 = scalar_lea.vmem %s3, %s231
      %v233 = vld [vmem:[%s217] sm:$0xff]
      %v234 = vld [vmem:[%s217 + $0x8] sm:$0xff]
      %v235 = vld [vmem:[%s217 + $0x10] sm:$0x3]
      %v236 = vld [vmem:[%s217 + $0x18] sm:$0xff]
      %v237 = vld [vmem:[%s217 + $0x20] sm:$0xff]
      %v238 = vld [vmem:[%s217 + $0x28] sm:$0x3]
      %v239 = vld [vmem:[%s217 + $0x30] sm:$0xff]
      %v240 = vld [vmem:[%s217 + $0x38] sm:$0xff]
      %v241 = vld [vmem:[%s217 + $0x40] sm:$0x3]
      %v242 = vld [vmem:[%s217 + $0x48] sm:$0xff]
      %v243 = vld [vmem:[%s217 + $0x50] sm:$0xff]
      %v244 = vld [vmem:[%s217 + $0x58] sm:$0x3]
      %v245 = vld [vmem:[%s217 + $0x60] sm:$0xff]
      %v246 = vld [vmem:[%s217 + $0x68] sm:$0xff]
      %v247 = vld [vmem:[%s217 + $0x70] sm:$0x3]
      %v248 = vld [vmem:[%s217 + $0x78] sm:$0xff]
      %v249 = vld [vmem:[%s217 + $0x80] sm:$0xff]
      %v250 = vld [vmem:[%s217 + $0x88] sm:$0x3]
      %v251 = vld [vmem:[%s217 + $0x90] sm:$0xff]
      %v252 = vld [vmem:[%s217 + $0x98] sm:$0xff]
      %v253 = vld [vmem:[%s217 + $0xa0] sm:$0x3]
      %v254 = vld [vmem:[%s217 + $0xa8] sm:$0xff]
      %v255 = vld [vmem:[%s217 + $0xb0] sm:$0xff]
      %v256 = vld [vmem:[%s217 + $0xb8] sm:$0x3]
      %v257 = vld [vmem:[%s217 + $0xc0] sm:$0xff]
      %v258 = vld [vmem:[%s217 + $0xc8] sm:$0xff]
      %v259 = vld [vmem:[%s217 + $0xd0] sm:$0x3]
      %v260 = vld [vmem:[%s217 + $0xd8] sm:$0xff]
      %v261 = vld [vmem:[%s217 + $0xe0] sm:$0xff]
      %v262 = vld [vmem:[%s217 + $0xe8] sm:$0x3]
      %v263 = vld [vmem:[%s217 + $0xf0] sm:$0xff]
      %v264 = vld [vmem:[%s217 + $0xf8] sm:$0xff]
      %v265 = vld [vmem:[%s217 + $0x100] sm:$0x3]
      %v266 = vld [vmem:[%s217 + $0x108] sm:$0xff]
      %v267 = vld [vmem:[%s217 + $0x110] sm:$0xff]
      %v268 = vld [vmem:[%s217 + $0x118] sm:$0x3]
      %v269 = vld [vmem:[%s217 + $0x120] sm:$0xff]
      %v270 = vld [vmem:[%s217 + $0x128] sm:$0xff]
      %v271 = vld [vmem:[%s217 + $0x130] sm:$0x3]
      %v272 = vld [vmem:[%s217 + $0x138] sm:$0xff]
      %v273 = vld [vmem:[%s217 + $0x140] sm:$0xff]
      %v274 = vld [vmem:[%s217 + $0x148] sm:$0x3]
      %v275 = vld [vmem:[%s217 + $0x150] sm:$0xff]
      %v276 = vld [vmem:[%s217 + $0x158] sm:$0xff]
      %v277 = vld [vmem:[%s217 + $0x160] sm:$0x3]
      %v278 = vld [vmem:[%s217 + $0x168] sm:$0xff]
      %v279 = vld [vmem:[%s217 + $0x170] sm:$0xff]
      %v280 = vld [vmem:[%s217 + $0x178] sm:$0x3]
      %v281 = vld [vmem:[%s217 + $0x180] sm:$0xff]
      %v282 = vld [vmem:[%s217 + $0x188] sm:$0xff]
      %v283 = vld [vmem:[%s217 + $0x190] sm:$0x3]
      %v284 = vld [vmem:[%s217 + $0x198] sm:$0xff]
      %v285 = vld [vmem:[%s217 + $0x1a0] sm:$0xff]
      %v286 = vld [vmem:[%s217 + $0x1a8] sm:$0x3]
      %v287 = vld [vmem:[%s221] sm:$0xff]
      %v288 = vld [vmem:[%s221 + $0x8] sm:$0x1]
      %v289 = vld [vmem:[%s224] sm:$0x1]
      %v291 = vperm.slane %v289, 0
      %v293 = vperm.slane %v287, 0
      %v294 = vmul.f32 %v233, %v293
      %v295 = vmul.f32 %v234, %v293
      %v296 = vmul.f32 %v236, %v293
      %v297 = vmul.f32 %v237, %v293
      %v298 = vmul.f32 %v239, %v293
      %v299 = vmul.f32 %v240, %v293
      %v300 = vmul.f32 %v242, %v293
      %v301 = vmul.f32 %v243, %v293
      %v302 = vmul.f32 %v245, %v293
      %v303 = vmul.f32 %v246, %v293
      %v304 = vmul.f32 %v248, %v293
      %v305 = vmul.f32 %v249, %v293
      %v306 = vmul.f32 %v251, %v293
      %v307 = vmul.f32 %v252, %v293
      %v308 = vmul.f32 %v254, %v293
      %v309 = vmul.f32 %v255, %v293
      %v310 = vmul.f32 %v257, %v293
      %v311 = vmul.f32 %v258, %v293
      %v312 = vmul.f32 %v260, %v293
      %v313 = vmul.f32 %v261, %v293
      %v314 = vmul.f32 %v263, %v293
      %v315 = vmul.f32 %v264, %v293
      %v316 = vmul.f32 %v266, %v293
      %v317 = vmul.f32 %v267, %v293
      %v318 = vmul.f32 %v269, %v293
      %v319 = vmul.f32 %v270, %v293
      %v320 = vmul.f32 %v272, %v293
      %v321 = vmul.f32 %v273, %v293
      %v322 = vmul.f32 %v275, %v293
      %v323 = vmul.f32 %v276, %v293
      %v324 = vmul.f32 %v278, %v293
      %v325 = vmul.f32 %v279, %v293
      %v326 = vadd.f32 %v291, %v294
      %v327 = vadd.f32 %v291, %v295
      %v328 = vadd.f32 %v291, %v296
      %v329 = vadd.f32 %v291, %v297
      %v330 = vadd.f32 %v291, %v298
      %v331 = vadd.f32 %v291, %v299
      %v332 = vadd.f32 %v291, %v300
      %v333 = vadd.f32 %v291, %v301
      %v334 = vadd.f32 %v291, %v302
      %v335 = vadd.f32 %v291, %v303
      %v336 = vadd.f32 %v291, %v304
      %v337 = vadd.f32 %v291, %v305
      %v338 = vadd.f32 %v291, %v306
      %v339 = vadd.f32 %v291, %v307
      %v340 = vadd.f32 %v291, %v308
      %v341 = vadd.f32 %v291, %v309
      %v342 = vadd.f32 %v291, %v310
      %v343 = vadd.f32 %v291, %v311
      %v344 = vadd.f32 %v291, %v312
      %v345 = vadd.f32 %v291, %v313
      %v346 = vadd.f32 %v291, %v314
      %v347 = vadd.f32 %v291, %v315
      %v348 = vadd.f32 %v291, %v316
      %v349 = vadd.f32 %v291, %v317
      %v350 = vadd.f32 %v291, %v318
      %v351 = vadd.f32 %v291, %v319
      %v352 = vadd.f32 %v291, %v320
      %v353 = vadd.f32 %v291, %v321
      %v354 = vadd.f32 %v291, %v322
      %v355 = vadd.f32 %v291, %v323
      %v356 = vadd.f32 %v291, %v324
      %v357 = vadd.f32 %v291, %v325
      %v358 = vperm.slane %v287, 1
      %v359 = vmul.f32 %v233, %v358
      %v360 = vmul.f32 %v234, %v358
      %v361 = vmul.f32 %v235, %v358
      %v362 = vmul.f32 %v236, %v358
      %v363 = vmul.f32 %v237, %v358
      %v364 = vmul.f32 %v238, %v358
      %v365 = vmul.f32 %v239, %v358
      %v366 = vmul.f32 %v240, %v358
      %v367 = vmul.f32 %v241, %v358
      %v368 = vmul.f32 %v242, %v358
      %v369 = vmul.f32 %v243, %v358
      %v370 = vmul.f32 %v244, %v358
      %v371 = vmul.f32 %v245, %v358
      %v372 = vmul.f32 %v246, %v358
      %v373 = vmul.f32 %v247, %v358
      %v374 = vmul.f32 %v248, %v358
      %v375 = vmul.f32 %v249, %v358
      %v376 = vmul.f32 %v250, %v358
      %v377 = vmul.f32 %v251, %v358
      %v378 = vmul.f32 %v252, %v358
      %v379 = vmul.f32 %v253, %v358
      %v380 = vmul.f32 %v254, %v358
      %v381 = vmul.f32 %v255, %v358
      %v382 = vmul.f32 %v256, %v358
      %v383 = vmul.f32 %v257, %v358
      %v384 = vmul.f32 %v258, %v358
      %v385 = vmul.f32 %v259, %v358
      %v386 = vmul.f32 %v260, %v358
      %v387 = vmul.f32 %v261, %v358
      %v388 = vmul.f32 %v262, %v358
      %v389 = vmul.f32 %v263, %v358
      %v390 = vmul.f32 %v264, %v358
      %v391 = vmul.f32 %v265, %v358
      %v392 = vmul.f32 %v266, %v358
      %v393 = vmul.f32 %v267, %v358
      %v394 = vmul.f32 %v268, %v358
      %v395 = vmul.f32 %v269, %v358
      %v396 = vmul.f32 %v270, %v358
      %v397 = vmul.f32 %v271, %v358
      %v398 = vmul.f32 %v272, %v358
      %v399 = vmul.f32 %v273, %v358
      %v400 = vmul.f32 %v274, %v358
      %v401 = vmul.f32 %v275, %v358
      %v402 = vmul.f32 %v276, %v358
      %v403 = vmul.f32 %v277, %v358
      %v404 = vmul.f32 %v278, %v358
      %v405 = vmul.f32 %v279, %v358
      %v406 = vmul.f32 %v280, %v358
      %vm455 = vcmask 1046528
      %v456 = vrot.slane %v359, 1
      %v457 = vrot.slane %v360, 1
      %v458 = vsel %vm455, %v456, %v457
      %v459 = vrot.slane %v361, 1
      %v460 = vsel %vm455, %v457, %v459
      %v461 = vrot.slane %v362, 1
      %v462 = vrot.slane %v363, 1
      %v463 = vsel %vm455, %v461, %v462
      %v464 = vrot.slane %v364, 1
      %v465 = vsel %vm455, %v462, %v464
      %v466 = vrot.slane %v365, 1
      %v467 = vrot.slane %v366, 1
      %v468 = vsel %vm455, %v466, %v467
      %v469 = vrot.slane %v367, 1
      %v470 = vsel %vm455, %v467, %v469
      %v471 = vrot.slane %v368, 1
      %v472 = vrot.slane %v369, 1
      %v473 = vsel %vm455, %v471, %v472
      %v474 = vrot.slane %v370, 1
      %v475 = vsel %vm455, %v472, %v474
      %v476 = vrot.slane %v371, 1
      %v477 = vrot.slane %v372, 1
      %v478 = vsel %vm455, %v476, %v477
      %v479 = vrot.slane %v373, 1
      %v480 = vsel %vm455, %v477, %v479
      %v481 = vrot.slane %v374, 1
      %v482 = vrot.slane %v375, 1
      %v483 = vsel %vm455, %v481, %v482
      %v484 = vrot.slane %v376, 1
      %v485 = vsel %vm455, %v482, %v484
      %v486 = vrot.slane %v377, 1
      %v487 = vrot.slane %v378, 1
      %v488 = vsel %vm455, %v486, %v487
      %v489 = vrot.slane %v379, 1
      %v490 = vsel %vm455, %v487, %v489
      %v491 = vrot.slane %v380, 1
      %v492 = vrot.slane %v381, 1
      %v493 = vsel %vm455, %v491, %v492
      %v494 = vrot.slane %v382, 1
      %v495 = vsel %vm455, %v492, %v494
      %v496 = vrot.slane %v383, 1
      %v497 = vrot.slane %v384, 1
      %v498 = vsel %vm455, %v496, %v497
      %v499 = vrot.slane %v385, 1
      %v500 = vsel %vm455, %v497, %v499
      %v501 = vrot.slane %v386, 1
      %v502 = vrot.slane %v387, 1
      %v503 = vsel %vm455, %v501, %v502
      %v504 = vrot.slane %v388, 1
      %v505 = vsel %vm455, %v502, %v504
      %v506 = vrot.slane %v389, 1
      %v507 = vrot.slane %v390, 1
      %v508 = vsel %vm455, %v506, %v507
      %v509 = vrot.slane %v391, 1
      %v510 = vsel %vm455, %v507, %v509
      %v511 = vrot.slane %v392, 1
      %v512 = vrot.slane %v393, 1
      %v513 = vsel %vm455, %v511, %v512
      %v514 = vrot.slane %v394, 1
      %v515 = vsel %vm455, %v512, %v514
      %v516 = vrot.slane %v395, 1
      %v517 = vrot.slane %v396, 1
      %v518 = vsel %vm455, %v516, %v517
      %v519 = vrot.slane %v397, 1
      %v520 = vsel %vm455, %v517, %v519
      %v521 = vrot.slane %v398, 1
      %v522 = vrot.slane %v399, 1
      %v523 = vsel %vm455, %v521, %v522
      %v524 = vrot.slane %v400, 1
      %v525 = vsel %vm455, %v522, %v524
      %v526 = vrot.slane %v401, 1
      %v527 = vrot.slane %v402, 1
      %v528 = vsel %vm455, %v526, %v527
      %v529 = vrot.slane %v403, 1
      %v530 = vsel %vm455, %v527, %v529
      %v531 = vrot.slane %v404, 1
      %v532 = vrot.slane %v405, 1
      %v533 = vsel %vm455, %v531, %v532
      %v534 = vrot.slane %v406, 1
      %v535 = vsel %vm455, %v532, %v534
      %v568 = vadd.f32 %v326, %v458
      %v569 = vadd.f32 %v327, %v460
      %v570 = vadd.f32 %v328, %v463
      %v571 = vadd.f32 %v329, %v465
      %v572 = vadd.f32 %v330, %v468
      %v573 = vadd.f32 %v331, %v470
      %v574 = vadd.f32 %v332, %v473
      %v575 = vadd.f32 %v333, %v475
      %v576 = vadd.f32 %v334, %v478
      %v577 = vadd.f32 %v335, %v480
      %v578 = vadd.f32 %v336, %v483
      %v579 = vadd.f32 %v337, %v485
      %v580 = vadd.f32 %v338, %v488
      %v581 = vadd.f32 %v339, %v490
      %v582 = vadd.f32 %v340, %v493
      %v583 = vadd.f32 %v341, %v495
      %v584 = vadd.f32 %v342, %v498
      %v585 = vadd.f32 %v343, %v500
      %v586 = vadd.f32 %v344, %v503
      %v587 = vadd.f32 %v345, %v505
      %v588 = vadd.f32 %v346, %v508
      %v589 = vadd.f32 %v347, %v510
      %v590 = vadd.f32 %v348, %v513
      %v591 = vadd.f32 %v349, %v515
      %v592 = vadd.f32 %v350, %v518
      %v593 = vadd.f32 %v351, %v520
      %v594 = vadd.f32 %v352, %v523
      %v595 = vadd.f32 %v353, %v525
      %v596 = vadd.f32 %v354, %v528
      %v597 = vadd.f32 %v355, %v530
      %v598 = vadd.f32 %v356, %v533
      %v599 = vadd.f32 %v357, %v535
      %v600 = vperm.slane %v287, 2
      %v601 = vmul.f32 %v233, %v600
      %v602 = vmul.f32 %v234, %v600
      %v603 = vmul.f32 %v235, %v600
      %v604 = vmul.f32 %v236, %v600
      %v605 = vmul.f32 %v237, %v600
      %v606 = vmul.f32 %v238, %v600
      %v607 = vmul.f32 %v239, %v600
      %v608 = vmul.f32 %v240, %v600
      %v609 = vmul.f32 %v241, %v600
      %v610 = vmul.f32 %v242, %v600
      %v611 = vmul.f32 %v243, %v600
      %v612 = vmul.f32 %v244, %v600
      %v613 = vmul.f32 %v245, %v600
      %v614 = vmul.f32 %v246, %v600
      %v615 = vmul.f32 %v247, %v600
      %v616 = vmul.f32 %v248, %v600
      %v617 = vmul.f32 %v249, %v600
      %v618 = vmul.f32 %v250, %v600
      %v619 = vmul.f32 %v251, %v600
      %v620 = vmul.f32 %v252, %v600
      %v621 = vmul.f32 %v253, %v600
      %v622 = vmul.f32 %v254, %v600
      %v623 = vmul.f32 %v255, %v600
      %v624 = vmul.f32 %v256, %v600
      %v625 = vmul.f32 %v257, %v600
      %v626 = vmul.f32 %v258, %v600
      %v627 = vmul.f32 %v259, %v600
      %v628 = vmul.f32 %v260, %v600
      %v629 = vmul.f32 %v261, %v600
      %v630 = vmul.f32 %v262, %v600
      %v631 = vmul.f32 %v263, %v600
      %v632 = vmul.f32 %v264, %v600
      %v633 = vmul.f32 %v265, %v600
      %v634 = vmul.f32 %v266, %v600
      %v635 = vmul.f32 %v267, %v600
      %v636 = vmul.f32 %v268, %v600
      %v637 = vmul.f32 %v269, %v600
      %v638 = vmul.f32 %v270, %v600
      %v639 = vmul.f32 %v271, %v600
      %v640 = vmul.f32 %v272, %v600
      %v641 = vmul.f32 %v273, %v600
      %v642 = vmul.f32 %v274, %v600
      %v643 = vmul.f32 %v275, %v600
      %v644 = vmul.f32 %v276, %v600
      %v645 = vmul.f32 %v277, %v600
      %v646 = vmul.f32 %v278, %v600
      %v647 = vmul.f32 %v279, %v600
      %v648 = vmul.f32 %v280, %v600
      %vm697 = vcmask 1045504
      %v698 = vrot.slane %v601, 2
      %v699 = vrot.slane %v602, 2
      %v700 = vsel %vm697, %v698, %v699
      %v701 = vrot.slane %v603, 2
      %v702 = vsel %vm697, %v699, %v701
      %v703 = vrot.slane %v604, 2
      %v704 = vrot.slane %v605, 2
      %v705 = vsel %vm697, %v703, %v704
      %v706 = vrot.slane %v606, 2
      %v707 = vsel %vm697, %v704, %v706
      %v708 = vrot.slane %v607, 2
      %v709 = vrot.slane %v608, 2
      %v710 = vsel %vm697, %v708, %v709
      %v711 = vrot.slane %v609, 2
      %v712 = vsel %vm697, %v709, %v711
      %v713 = vrot.slane %v610, 2
      %v714 = vrot.slane %v611, 2
      %v715 = vsel %vm697, %v713, %v714
      %v716 = vrot.slane %v612, 2
      %v717 = vsel %vm697, %v714, %v716
      %v718 = vrot.slane %v613, 2
      %v719 = vrot.slane %v614, 2
      %v720 = vsel %vm697, %v718, %v719
      %v721 = vrot.slane %v615, 2
      %v722 = vsel %vm697, %v719, %v721
      %v723 = vrot.slane %v616, 2
      %v724 = vrot.slane %v617, 2
      %v725 = vsel %vm697, %v723, %v724
      %v726 = vrot.slane %v618, 2
      %v727 = vsel %vm697, %v724, %v726
      %v728 = vrot.slane %v619, 2
      %v729 = vrot.slane %v620, 2
      %v730 = vsel %vm697, %v728, %v729
      %v731 = vrot.slane %v621, 2
      %v732 = vsel %vm697, %v729, %v731
      %v733 = vrot.slane %v622, 2
      %v734 = vrot.slane %v623, 2
      %v735 = vsel %vm697, %v733, %v734
      %v736 = vrot.slane %v624, 2
      %v737 = vsel %vm697, %v734, %v736
      %v738 = vrot.slane %v625, 2
      %v739 = vrot.slane %v626, 2
      %v740 = vsel %vm697, %v738, %v739
      %v741 = vrot.slane %v627, 2
      %v742 = vsel %vm697, %v739, %v741
      %v743 = vrot.slane %v628, 2
      %v744 = vrot.slane %v629, 2
      %v745 = vsel %vm697, %v743, %v744
      %v746 = vrot.slane %v630, 2
      %v747 = vsel %vm697, %v744, %v746
      %v748 = vrot.slane %v631, 2
      %v749 = vrot.slane %v632, 2
      %v750 = vsel %vm697, %v748, %v749
      %v751 = vrot.slane %v633, 2
      %v752 = vsel %vm697, %v749, %v751
      %v753 = vrot.slane %v634, 2
      %v754 = vrot.slane %v635, 2
      %v755 = vsel %vm697, %v753, %v754
      %v756 = vrot.slane %v636, 2
      %v757 = vsel %vm697, %v754, %v756
      %v758 = vrot.slane %v637, 2
      %v759 = vrot.slane %v638, 2
      %v760 = vsel %vm697, %v758, %v759
      %v761 = vrot.slane %v639, 2
      %v762 = vsel %vm697, %v759, %v761
      %v763 = vrot.slane %v640, 2
      %v764 = vrot.slane %v641, 2
      %v765 = vsel %vm697, %v763, %v764
      %v766 = vrot.slane %v642, 2
      %v767 = vsel %vm697, %v764, %v766
      %v768 = vrot.slane %v643, 2
      %v769 = vrot.slane %v644, 2
      %v770 = vsel %vm697, %v768, %v769
      %v771 = vrot.slane %v645, 2
      %v772 = vsel %vm697, %v769, %v771
      %v773 = vrot.slane %v646, 2
      %v774 = vrot.slane %v647, 2
      %v775 = vsel %vm697, %v773, %v774
      %v776 = vrot.slane %v648, 2
      %v777 = vsel %vm697, %v774, %v776
      %v810 = vadd.f32 %v568, %v700
      %v811 = vadd.f32 %v569, %v702
      %v812 = vadd.f32 %v570, %v705
      %v813 = vadd.f32 %v571, %v707
      %v814 = vadd.f32 %v572, %v710
      %v815 = vadd.f32 %v573, %v712
      %v816 = vadd.f32 %v574, %v715
      %v817 = vadd.f32 %v575, %v717
      %v818 = vadd.f32 %v576, %v720
      %v819 = vadd.f32 %v577, %v722
      %v820 = vadd.f32 %v578, %v725
      %v821 = vadd.f32 %v579, %v727
      %v822 = vadd.f32 %v580, %v730
      %v823 = vadd.f32 %v581, %v732
      %v824 = vadd.f32 %v582, %v735
      %v825 = vadd.f32 %v583, %v737
      %v826 = vadd.f32 %v584, %v740
      %v827 = vadd.f32 %v585, %v742
      %v828 = vadd.f32 %v586, %v745
      %v829 = vadd.f32 %v587, %v747
      %v830 = vadd.f32 %v588, %v750
      %v831 = vadd.f32 %v589, %v752
      %v832 = vadd.f32 %v590, %v755
      %v833 = vadd.f32 %v591, %v757
      %v834 = vadd.f32 %v592, %v760
      %v835 = vadd.f32 %v593, %v762
      %v836 = vadd.f32 %v594, %v765
      %v837 = vadd.f32 %v595, %v767
      %v838 = vadd.f32 %v596, %v770
      %v839 = vadd.f32 %v597, %v772
      %v840 = vadd.f32 %v598, %v775
      %v841 = vadd.f32 %v599, %v777
      %v842 = vperm.slane %v287, 3
      %v843 = vmul.f32 %v236, %v842
      %v844 = vmul.f32 %v237, %v842
      %v845 = vmul.f32 %v239, %v842
      %v846 = vmul.f32 %v240, %v842
      %v847 = vmul.f32 %v242, %v842
      %v848 = vmul.f32 %v243, %v842
      %v849 = vmul.f32 %v245, %v842
      %v850 = vmul.f32 %v246, %v842
      %v851 = vmul.f32 %v248, %v842
      %v852 = vmul.f32 %v249, %v842
      %v853 = vmul.f32 %v251, %v842
      %v854 = vmul.f32 %v252, %v842
      %v855 = vmul.f32 %v254, %v842
      %v856 = vmul.f32 %v255, %v842
      %v857 = vmul.f32 %v257, %v842
      %v858 = vmul.f32 %v258, %v842
      %v859 = vmul.f32 %v260, %v842
      %v860 = vmul.f32 %v261, %v842
      %v861 = vmul.f32 %v263, %v842
      %v862 = vmul.f32 %v264, %v842
      %v863 = vmul.f32 %v266, %v842
      %v864 = vmul.f32 %v267, %v842
      %v865 = vmul.f32 %v269, %v842
      %v866 = vmul.f32 %v270, %v842
      %v867 = vmul.f32 %v272, %v842
      %v868 = vmul.f32 %v273, %v842
      %v869 = vmul.f32 %v275, %v842
      %v870 = vmul.f32 %v276, %v842
      %v871 = vmul.f32 %v278, %v842
      %v872 = vmul.f32 %v279, %v842
      %v873 = vmul.f32 %v281, %v842
      %v874 = vmul.f32 %v282, %v842
      %v875 = vadd.f32 %v810, %v843
      %v876 = vadd.f32 %v811, %v844
      %v877 = vadd.f32 %v812, %v845
      %v878 = vadd.f32 %v813, %v846
      %v879 = vadd.f32 %v814, %v847
      %v880 = vadd.f32 %v815, %v848
      %v881 = vadd.f32 %v816, %v849
      %v882 = vadd.f32 %v817, %v850
      %v883 = vadd.f32 %v818, %v851
      %v884 = vadd.f32 %v819, %v852
      %v885 = vadd.f32 %v820, %v853
      %v886 = vadd.f32 %v821, %v854
      %v887 = vadd.f32 %v822, %v855
      %v888 = vadd.f32 %v823, %v856
      %v889 = vadd.f32 %v824, %v857
      %v890 = vadd.f32 %v825, %v858
      %v891 = vadd.f32 %v826, %v859
      %v892 = vadd.f32 %v827, %v860
      %v893 = vadd.f32 %v828, %v861
      %v894 = vadd.f32 %v829, %v862
      %v895 = vadd.f32 %v830, %v863
      %v896 = vadd.f32 %v831, %v864
      %v897 = vadd.f32 %v832, %v865
      %v898 = vadd.f32 %v833, %v866
      %v899 = vadd.f32 %v834, %v867
      %v900 = vadd.f32 %v835, %v868
      %v901 = vadd.f32 %v836, %v869
      %v902 = vadd.f32 %v837, %v870
      %v903 = vadd.f32 %v838, %v871
      %v904 = vadd.f32 %v839, %v872
      %v905 = vadd.f32 %v840, %v873
      %v906 = vadd.f32 %v841, %v874
      %v907 = vperm.slane %v287, 4
      %v908 = vmul.f32 %v236, %v907
      %v909 = vmul.f32 %v237, %v907
      %v910 = vmul.f32 %v238, %v907
      %v911 = vmul.f32 %v239, %v907
      %v912 = vmul.f32 %v240, %v907
      %v913 = vmul.f32 %v241, %v907
      %v914 = vmul.f32 %v242, %v907
      %v915 = vmul.f32 %v243, %v907
      %v916 = vmul.f32 %v244, %v907
      %v917 = vmul.f32 %v245, %v907
      %v918 = vmul.f32 %v246, %v907
      %v919 = vmul.f32 %v247, %v907
      %v920 = vmul.f32 %v248, %v907
      %v921 = vmul.f32 %v249, %v907
      %v922 = vmul.f32 %v250, %v907
      %v923 = vmul.f32 %v251, %v907
      %v924 = vmul.f32 %v252, %v907
      %v925 = vmul.f32 %v253, %v907
      %v926 = vmul.f32 %v254, %v907
      %v927 = vmul.f32 %v255, %v907
      %v928 = vmul.f32 %v256, %v907
      %v929 = vmul.f32 %v257, %v907
      %v930 = vmul.f32 %v258, %v907
      %v931 = vmul.f32 %v259, %v907
      %v932 = vmul.f32 %v260, %v907
      %v933 = vmul.f32 %v261, %v907
      %v934 = vmul.f32 %v262, %v907
      %v935 = vmul.f32 %v263, %v907
      %v936 = vmul.f32 %v264, %v907
      %v937 = vmul.f32 %v265, %v907
      %v938 = vmul.f32 %v266, %v907
      %v939 = vmul.f32 %v267, %v907
      %v940 = vmul.f32 %v268, %v907
      %v941 = vmul.f32 %v269, %v907
      %v942 = vmul.f32 %v270, %v907
      %v943 = vmul.f32 %v271, %v907
      %v944 = vmul.f32 %v272, %v907
      %v945 = vmul.f32 %v273, %v907
      %v946 = vmul.f32 %v274, %v907
      %v947 = vmul.f32 %v275, %v907
      %v948 = vmul.f32 %v276, %v907
      %v949 = vmul.f32 %v277, %v907
      %v950 = vmul.f32 %v278, %v907
      %v951 = vmul.f32 %v279, %v907
      %v952 = vmul.f32 %v280, %v907
      %v953 = vmul.f32 %v281, %v907
      %v954 = vmul.f32 %v282, %v907
      %v955 = vmul.f32 %v283, %v907
      %v1004 = vrot.slane %v908, 1
      %v1005 = vrot.slane %v909, 1
      %v1006 = vsel %vm455, %v1004, %v1005
      %v1007 = vrot.slane %v910, 1
      %v1008 = vsel %vm455, %v1005, %v1007
      %v1009 = vrot.slane %v911, 1
      %v1010 = vrot.slane %v912, 1
      %v1011 = vsel %vm455, %v1009, %v1010
      %v1012 = vrot.slane %v913, 1
      %v1013 = vsel %vm455, %v1010, %v1012
      %v1014 = vrot.slane %v914, 1
      %v1015 = vrot.slane %v915, 1
      %v1016 = vsel %vm455, %v1014, %v1015
      %v1017 = vrot.slane %v916, 1
      %v1018 = vsel %vm455, %v1015, %v1017
      %v1019 = vrot.slane %v917, 1
      %v1020 = vrot.slane %v918, 1
      %v1021 = vsel %vm455, %v1019, %v1020
      %v1022 = vrot.slane %v919, 1
      %v1023 = vsel %vm455, %v1020, %v1022
      %v1024 = vrot.slane %v920, 1
      %v1025 = vrot.slane %v921, 1
      %v1026 = vsel %vm455, %v1024, %v1025
      %v1027 = vrot.slane %v922, 1
      %v1028 = vsel %vm455, %v1025, %v1027
      %v1029 = vrot.slane %v923, 1
      %v1030 = vrot.slane %v924, 1
      %v1031 = vsel %vm455, %v1029, %v1030
      %v1032 = vrot.slane %v925, 1
      %v1033 = vsel %vm455, %v1030, %v1032
      %v1034 = vrot.slane %v926, 1
      %v1035 = vrot.slane %v927, 1
      %v1036 = vsel %vm455, %v1034, %v1035
      %v1037 = vrot.slane %v928, 1
      %v1038 = vsel %vm455, %v1035, %v1037
      %v1039 = vrot.slane %v929, 1
      %v1040 = vrot.slane %v930, 1
      %v1041 = vsel %vm455, %v1039, %v1040
      %v1042 = vrot.slane %v931, 1
      %v1043 = vsel %vm455, %v1040, %v1042
      %v1044 = vrot.slane %v932, 1
      %v1045 = vrot.slane %v933, 1
      %v1046 = vsel %vm455, %v1044, %v1045
      %v1047 = vrot.slane %v934, 1
      %v1048 = vsel %vm455, %v1045, %v1047
      %v1049 = vrot.slane %v935, 1
      %v1050 = vrot.slane %v936, 1
      %v1051 = vsel %vm455, %v1049, %v1050
      %v1052 = vrot.slane %v937, 1
      %v1053 = vsel %vm455, %v1050, %v1052
      %v1054 = vrot.slane %v938, 1
      %v1055 = vrot.slane %v939, 1
      %v1056 = vsel %vm455, %v1054, %v1055
      %v1057 = vrot.slane %v940, 1
      %v1058 = vsel %vm455, %v1055, %v1057
      %v1059 = vrot.slane %v941, 1
      %v1060 = vrot.slane %v942, 1
      %v1061 = vsel %vm455, %v1059, %v1060
      %v1062 = vrot.slane %v943, 1
      %v1063 = vsel %vm455, %v1060, %v1062
      %v1064 = vrot.slane %v944, 1
      %v1065 = vrot.slane %v945, 1
      %v1066 = vsel %vm455, %v1064, %v1065
      %v1067 = vrot.slane %v946, 1
      %v1068 = vsel %vm455, %v1065, %v1067
      %v1069 = vrot.slane %v947, 1
      %v1070 = vrot.slane %v948, 1
      %v1071 = vsel %vm455, %v1069, %v1070
      %v1072 = vrot.slane %v949, 1
      %v1073 = vsel %vm455, %v1070, %v1072
      %v1074 = vrot.slane %v950, 1
      %v1075 = vrot.slane %v951, 1
      %v1076 = vsel %vm455, %v1074, %v1075
      %v1077 = vrot.slane %v952, 1
      %v1078 = vsel %vm455, %v1075, %v1077
      %v1079 = vrot.slane %v953, 1
      %v1080 = vrot.slane %v954, 1
      %v1081 = vsel %vm455, %v1079, %v1080
      %v1082 = vrot.slane %v955, 1
      %v1083 = vsel %vm455, %v1080, %v1082
      %v1116 = vadd.f32 %v875, %v1006
      %v1117 = vadd.f32 %v876, %v1008
      %v1118 = vadd.f32 %v877, %v1011
      %v1119 = vadd.f32 %v878, %v1013
      %v1120 = vadd.f32 %v879, %v1016
      %v1121 = vadd.f32 %v880, %v1018
      %v1122 = vadd.f32 %v881, %v1021
      %v1123 = vadd.f32 %v882, %v1023
      %v1124 = vadd.f32 %v883, %v1026
      %v1125 = vadd.f32 %v884, %v1028
      %v1126 = vadd.f32 %v885, %v1031
      %v1127 = vadd.f32 %v886, %v1033
      %v1128 = vadd.f32 %v887, %v1036
      %v1129 = vadd.f32 %v888, %v1038
      %v1130 = vadd.f32 %v889, %v1041
      %v1131 = vadd.f32 %v890, %v1043
      %v1132 = vadd.f32 %v891, %v1046
      %v1133 = vadd.f32 %v892, %v1048
      %v1134 = vadd.f32 %v893, %v1051
      %v1135 = vadd.f32 %v894, %v1053
      %v1136 = vadd.f32 %v895, %v1056
      %v1137 = vadd.f32 %v896, %v1058
      %v1138 = vadd.f32 %v897, %v1061
      %v1139 = vadd.f32 %v898, %v1063
      %v1140 = vadd.f32 %v899, %v1066
      %v1141 = vadd.f32 %v900, %v1068
      %v1142 = vadd.f32 %v901, %v1071
      %v1143 = vadd.f32 %v902, %v1073
      %v1144 = vadd.f32 %v903, %v1076
      %v1145 = vadd.f32 %v904, %v1078
      %v1146 = vadd.f32 %v905, %v1081
      %v1147 = vadd.f32 %v906, %v1083
      %v1148 = vperm.slane %v287, 5
      %v1149 = vmul.f32 %v236, %v1148
      %v1150 = vmul.f32 %v237, %v1148
      %v1151 = vmul.f32 %v238, %v1148
      %v1152 = vmul.f32 %v239, %v1148
      %v1153 = vmul.f32 %v240, %v1148
      %v1154 = vmul.f32 %v241, %v1148
      %v1155 = vmul.f32 %v242, %v1148
      %v1156 = vmul.f32 %v243, %v1148
      %v1157 = vmul.f32 %v244, %v1148
      %v1158 = vmul.f32 %v245, %v1148
      %v1159 = vmul.f32 %v246, %v1148
      %v1160 = vmul.f32 %v247, %v1148
      %v1161 = vmul.f32 %v248, %v1148
      %v1162 = vmul.f32 %v249, %v1148
      %v1163 = vmul.f32 %v250, %v1148
      %v1164 = vmul.f32 %v251, %v1148
      %v1165 = vmul.f32 %v252, %v1148
      %v1166 = vmul.f32 %v253, %v1148
      %v1167 = vmul.f32 %v254, %v1148
      %v1168 = vmul.f32 %v255, %v1148
      %v1169 = vmul.f32 %v256, %v1148
      %v1170 = vmul.f32 %v257, %v1148
      %v1171 = vmul.f32 %v258, %v1148
      %v1172 = vmul.f32 %v259, %v1148
      %v1173 = vmul.f32 %v260, %v1148
      %v1174 = vmul.f32 %v261, %v1148
      %v1175 = vmul.f32 %v262, %v1148
      %v1176 = vmul.f32 %v263, %v1148
      %v1177 = vmul.f32 %v264, %v1148
      %v1178 = vmul.f32 %v265, %v1148
      %v1179 = vmul.f32 %v266, %v1148
      %v1180 = vmul.f32 %v267, %v1148
      %v1181 = vmul.f32 %v268, %v1148
      %v1182 = vmul.f32 %v269, %v1148
      %v1183 = vmul.f32 %v270, %v1148
      %v1184 = vmul.f32 %v271, %v1148
      %v1185 = vmul.f32 %v272, %v1148
      %v1186 = vmul.f32 %v273, %v1148
      %v1187 = vmul.f32 %v274, %v1148
      %v1188 = vmul.f32 %v275, %v1148
      %v1189 = vmul.f32 %v276, %v1148
      %v1190 = vmul.f32 %v277, %v1148
      %v1191 = vmul.f32 %v278, %v1148
      %v1192 = vmul.f32 %v279, %v1148
      %v1193 = vmul.f32 %v280, %v1148
      %v1194 = vmul.f32 %v281, %v1148
      %v1195 = vmul.f32 %v282, %v1148
      %v1196 = vmul.f32 %v283, %v1148
      %v1245 = vrot.slane %v1149, 2
      %v1246 = vrot.slane %v1150, 2
      %v1247 = vsel %vm697, %v1245, %v1246
      %v1248 = vrot.slane %v1151, 2
      %v1249 = vsel %vm697, %v1246, %v1248
      %v1250 = vrot.slane %v1152, 2
      %v1251 = vrot.slane %v1153, 2
      %v1252 = vsel %vm697, %v1250, %v1251
      %v1253 = vrot.slane %v1154, 2
      %v1254 = vsel %vm697, %v1251, %v1253
      %v1255 = vrot.slane %v1155, 2
      %v1256 = vrot.slane %v1156, 2
      %v1257 = vsel %vm697, %v1255, %v1256
      %v1258 = vrot.slane %v1157, 2
      %v1259 = vsel %vm697, %v1256, %v1258
      %v1260 = vrot.slane %v1158, 2
      %v1261 = vrot.slane %v1159, 2
      %v1262 = vsel %vm697, %v1260, %v1261
      %v1263 = vrot.slane %v1160, 2
      %v1264 = vsel %vm697, %v1261, %v1263
      %v1265 = vrot.slane %v1161, 2
      %v1266 = vrot.slane %v1162, 2
      %v1267 = vsel %vm697, %v1265, %v1266
      %v1268 = vrot.slane %v1163, 2
      %v1269 = vsel %vm697, %v1266, %v1268
      %v1270 = vrot.slane %v1164, 2
      %v1271 = vrot.slane %v1165, 2
      %v1272 = vsel %vm697, %v1270, %v1271
      %v1273 = vrot.slane %v1166, 2
      %v1274 = vsel %vm697, %v1271, %v1273
      %v1275 = vrot.slane %v1167, 2
      %v1276 = vrot.slane %v1168, 2
      %v1277 = vsel %vm697, %v1275, %v1276
      %v1278 = vrot.slane %v1169, 2
      %v1279 = vsel %vm697, %v1276, %v1278
      %v1280 = vrot.slane %v1170, 2
      %v1281 = vrot.slane %v1171, 2
      %v1282 = vsel %vm697, %v1280, %v1281
      %v1283 = vrot.slane %v1172, 2
      %v1284 = vsel %vm697, %v1281, %v1283
      %v1285 = vrot.slane %v1173, 2
      %v1286 = vrot.slane %v1174, 2
      %v1287 = vsel %vm697, %v1285, %v1286
      %v1288 = vrot.slane %v1175, 2
      %v1289 = vsel %vm697, %v1286, %v1288
      %v1290 = vrot.slane %v1176, 2
      %v1291 = vrot.slane %v1177, 2
      %v1292 = vsel %vm697, %v1290, %v1291
      %v1293 = vrot.slane %v1178, 2
      %v1294 = vsel %vm697, %v1291, %v1293
      %v1295 = vrot.slane %v1179, 2
      %v1296 = vrot.slane %v1180, 2
      %v1297 = vsel %vm697, %v1295, %v1296
      %v1298 = vrot.slane %v1181, 2
      %v1299 = vsel %vm697, %v1296, %v1298
      %v1300 = vrot.slane %v1182, 2
      %v1301 = vrot.slane %v1183, 2
      %v1302 = vsel %vm697, %v1300, %v1301
      %v1303 = vrot.slane %v1184, 2
      %v1304 = vsel %vm697, %v1301, %v1303
      %v1305 = vrot.slane %v1185, 2
      %v1306 = vrot.slane %v1186, 2
      %v1307 = vsel %vm697, %v1305, %v1306
      %v1308 = vrot.slane %v1187, 2
      %v1309 = vsel %vm697, %v1306, %v1308
      %v1310 = vrot.slane %v1188, 2
      %v1311 = vrot.slane %v1189, 2
      %v1312 = vsel %vm697, %v1310, %v1311
      %v1313 = vrot.slane %v1190, 2
      %v1314 = vsel %vm697, %v1311, %v1313
      %v1315 = vrot.slane %v1191, 2
      %v1316 = vrot.slane %v1192, 2
      %v1317 = vsel %vm697, %v1315, %v1316
      %v1318 = vrot.slane %v1193, 2
      %v1319 = vsel %vm697, %v1316, %v1318
      %v1320 = vrot.slane %v1194, 2
      %v1321 = vrot.slane %v1195, 2
      %v1322 = vsel %vm697, %v1320, %v1321
      %v1323 = vrot.slane %v1196, 2
      %v1324 = vsel %vm697, %v1321, %v1323
      %v1357 = vadd.f32 %v1116, %v1247
      %v1358 = vadd.f32 %v1117, %v1249
      %v1359 = vadd.f32 %v1118, %v1252
      %v1360 = vadd.f32 %v1119, %v1254
      %v1361 = vadd.f32 %v1120, %v1257
      %v1362 = vadd.f32 %v1121, %v1259
      %v1363 = vadd.f32 %v1122, %v1262
      %v1364 = vadd.f32 %v1123, %v1264
      %v1365 = vadd.f32 %v1124, %v1267
      %v1366 = vadd.f32 %v1125, %v1269
      %v1367 = vadd.f32 %v1126, %v1272
      %v1368 = vadd.f32 %v1127, %v1274
      %v1369 = vadd.f32 %v1128, %v1277
      %v1370 = vadd.f32 %v1129, %v1279
      %v1371 = vadd.f32 %v1130, %v1282
      %v1372 = vadd.f32 %v1131, %v1284
      %v1373 = vadd.f32 %v1132, %v1287
      %v1374 = vadd.f32 %v1133, %v1289
      %v1375 = vadd.f32 %v1134, %v1292
      %v1376 = vadd.f32 %v1135, %v1294
      %v1377 = vadd.f32 %v1136, %v1297
      %v1378 = vadd.f32 %v1137, %v1299
      %v1379 = vadd.f32 %v1138, %v1302
      %v1380 = vadd.f32 %v1139, %v1304
      %v1381 = vadd.f32 %v1140, %v1307
      %v1382 = vadd.f32 %v1141, %v1309
      %v1383 = vadd.f32 %v1142, %v1312
      %v1384 = vadd.f32 %v1143, %v1314
      %v1385 = vadd.f32 %v1144, %v1317
      %v1386 = vadd.f32 %v1145, %v1319
      %v1387 = vadd.f32 %v1146, %v1322
      %v1388 = vadd.f32 %v1147, %v1324
      %v1389 = vperm.slane %v287, 6
      %v1390 = vmul.f32 %v239, %v1389
      %v1391 = vmul.f32 %v240, %v1389
      %v1392 = vmul.f32 %v242, %v1389
      %v1393 = vmul.f32 %v243, %v1389
      %v1394 = vmul.f32 %v245, %v1389
      %v1395 = vmul.f32 %v246, %v1389
      %v1396 = vmul.f32 %v248, %v1389
      %v1397 = vmul.f32 %v249, %v1389
      %v1398 = vmul.f32 %v251, %v1389
      %v1399 = vmul.f32 %v252, %v1389
      %v1400 = vmul.f32 %v254, %v1389
      %v1401 = vmul.f32 %v255, %v1389
      %v1402 = vmul.f32 %v257, %v1389
      %v1403 = vmul.f32 %v258, %v1389
      %v1404 = vmul.f32 %v260, %v1389
      %v1405 = vmul.f32 %v261, %v1389
      %v1406 = vmul.f32 %v263, %v1389
      %v1407 = vmul.f32 %v264, %v1389
      %v1408 = vmul.f32 %v266, %v1389
      %v1409 = vmul.f32 %v267, %v1389
      %v1410 = vmul.f32 %v269, %v1389
      %v1411 = vmul.f32 %v270, %v1389
      %v1412 = vmul.f32 %v272, %v1389
      %v1413 = vmul.f32 %v273, %v1389
      %v1414 = vmul.f32 %v275, %v1389
      %v1415 = vmul.f32 %v276, %v1389
      %v1416 = vmul.f32 %v278, %v1389
      %v1417 = vmul.f32 %v279, %v1389
      %v1418 = vmul.f32 %v281, %v1389
      %v1419 = vmul.f32 %v282, %v1389
      %v1420 = vmul.f32 %v284, %v1389
      %v1421 = vmul.f32 %v285, %v1389
      %v1422 = vadd.f32 %v1357, %v1390
      %v1423 = vadd.f32 %v1358, %v1391
      %v1424 = vadd.f32 %v1359, %v1392
      %v1425 = vadd.f32 %v1360, %v1393
      %v1426 = vadd.f32 %v1361, %v1394
      %v1427 = vadd.f32 %v1362, %v1395
      %v1428 = vadd.f32 %v1363, %v1396
      %v1429 = vadd.f32 %v1364, %v1397
      %v1430 = vadd.f32 %v1365, %v1398
      %v1431 = vadd.f32 %v1366, %v1399
      %v1432 = vadd.f32 %v1367, %v1400
      %v1433 = vadd.f32 %v1368, %v1401
      %v1434 = vadd.f32 %v1369, %v1402
      %v1435 = vadd.f32 %v1370, %v1403
      %v1436 = vadd.f32 %v1371, %v1404
      %v1437 = vadd.f32 %v1372, %v1405
      %v1438 = vadd.f32 %v1373, %v1406
      %v1439 = vadd.f32 %v1374, %v1407
      %v1440 = vadd.f32 %v1375, %v1408
      %v1441 = vadd.f32 %v1376, %v1409
      %v1442 = vadd.f32 %v1377, %v1410
      %v1443 = vadd.f32 %v1378, %v1411
      %v1444 = vadd.f32 %v1379, %v1412
      %v1445 = vadd.f32 %v1380, %v1413
      %v1446 = vadd.f32 %v1381, %v1414
      %v1447 = vadd.f32 %v1382, %v1415
      %v1448 = vadd.f32 %v1383, %v1416
      %v1449 = vadd.f32 %v1384, %v1417
      %v1450 = vadd.f32 %v1385, %v1418
      %v1451 = vadd.f32 %v1386, %v1419
      %v1452 = vadd.f32 %v1387, %v1420
      %v1453 = vadd.f32 %v1388, %v1421
      %v1454 = vperm.slane %v287, 7
      %v1455 = vmul.f32 %v239, %v1454
      %v1456 = vmul.f32 %v240, %v1454
      %v1457 = vmul.f32 %v241, %v1454
      %v1458 = vmul.f32 %v242, %v1454
      %v1459 = vmul.f32 %v243, %v1454
      %v1460 = vmul.f32 %v244, %v1454
      %v1461 = vmul.f32 %v245, %v1454
      %v1462 = vmul.f32 %v246, %v1454
      %v1463 = vmul.f32 %v247, %v1454
      %v1464 = vmul.f32 %v248, %v1454
      %v1465 = vmul.f32 %v249, %v1454
      %v1466 = vmul.f32 %v250, %v1454
      %v1467 = vmul.f32 %v251, %v1454
      %v1468 = vmul.f32 %v252, %v1454
      %v1469 = vmul.f32 %v253, %v1454
      %v1470 = vmul.f32 %v254, %v1454
      %v1471 = vmul.f32 %v255, %v1454
      %v1472 = vmul.f32 %v256, %v1454
      %v1473 = vmul.f32 %v257, %v1454
      %v1474 = vmul.f32 %v258, %v1454
      %v1475 = vmul.f32 %v259, %v1454
      %v1476 = vmul.f32 %v260, %v1454
      %v1477 = vmul.f32 %v261, %v1454
      %v1478 = vmul.f32 %v262, %v1454
      %v1479 = vmul.f32 %v263, %v1454
      %v1480 = vmul.f32 %v264, %v1454
      %v1481 = vmul.f32 %v265, %v1454
      %v1482 = vmul.f32 %v266, %v1454
      %v1483 = vmul.f32 %v267, %v1454
      %v1484 = vmul.f32 %v268, %v1454
      %v1485 = vmul.f32 %v269, %v1454
      %v1486 = vmul.f32 %v270, %v1454
      %v1487 = vmul.f32 %v271, %v1454
      %v1488 = vmul.f32 %v272, %v1454
      %v1489 = vmul.f32 %v273, %v1454
      %v1490 = vmul.f32 %v274, %v1454
      %v1491 = vmul.f32 %v275, %v1454
      %v1492 = vmul.f32 %v276, %v1454
      %v1493 = vmul.f32 %v277, %v1454
      %v1494 = vmul.f32 %v278, %v1454
      %v1495 = vmul.f32 %v279, %v1454
      %v1496 = vmul.f32 %v280, %v1454
      %v1497 = vmul.f32 %v281, %v1454
      %v1498 = vmul.f32 %v282, %v1454
      %v1499 = vmul.f32 %v283, %v1454
      %v1500 = vmul.f32 %v284, %v1454
      %v1501 = vmul.f32 %v285, %v1454
      %v1502 = vmul.f32 %v286, %v1454
      %v1551 = vrot.slane %v1455, 1
      %v1552 = vrot.slane %v1456, 1
      %v1553 = vsel %vm455, %v1551, %v1552
      %v1554 = vrot.slane %v1457, 1
      %v1555 = vsel %vm455, %v1552, %v1554
      %v1556 = vrot.slane %v1458, 1
      %v1557 = vrot.slane %v1459, 1
      %v1558 = vsel %vm455, %v1556, %v1557
      %v1559 = vrot.slane %v1460, 1
      %v1560 = vsel %vm455, %v1557, %v1559
      %v1561 = vrot.slane %v1461, 1
      %v1562 = vrot.slane %v1462, 1
      %v1563 = vsel %vm455, %v1561, %v1562
      %v1564 = vrot.slane %v1463, 1
      %v1565 = vsel %vm455, %v1562, %v1564
      %v1566 = vrot.slane %v1464, 1
      %v1567 = vrot.slane %v1465, 1
      %v1568 = vsel %vm455, %v1566, %v1567
      %v1569 = vrot.slane %v1466, 1
      %v1570 = vsel %vm455, %v1567, %v1569
      %v1571 = vrot.slane %v1467, 1
      %v1572 = vrot.slane %v1468, 1
      %v1573 = vsel %vm455, %v1571, %v1572
      %v1574 = vrot.slane %v1469, 1
      %v1575 = vsel %vm455, %v1572, %v1574
      %v1576 = vrot.slane %v1470, 1
      %v1577 = vrot.slane %v1471, 1
      %v1578 = vsel %vm455, %v1576, %v1577
      %v1579 = vrot.slane %v1472, 1
      %v1580 = vsel %vm455, %v1577, %v1579
      %v1581 = vrot.slane %v1473, 1
      %v1582 = vrot.slane %v1474, 1
      %v1583 = vsel %vm455, %v1581, %v1582
      %v1584 = vrot.slane %v1475, 1
      %v1585 = vsel %vm455, %v1582, %v1584
      %v1586 = vrot.slane %v1476, 1
      %v1587 = vrot.slane %v1477, 1
      %v1588 = vsel %vm455, %v1586, %v1587
      %v1589 = vrot.slane %v1478, 1
      %v1590 = vsel %vm455, %v1587, %v1589
      %v1591 = vrot.slane %v1479, 1
      %v1592 = vrot.slane %v1480, 1
      %v1593 = vsel %vm455, %v1591, %v1592
      %v1594 = vrot.slane %v1481, 1
      %v1595 = vsel %vm455, %v1592, %v1594
      %v1596 = vrot.slane %v1482, 1
      %v1597 = vrot.slane %v1483, 1
      %v1598 = vsel %vm455, %v1596, %v1597
      %v1599 = vrot.slane %v1484, 1
      %v1600 = vsel %vm455, %v1597, %v1599
      %v1601 = vrot.slane %v1485, 1
      %v1602 = vrot.slane %v1486, 1
      %v1603 = vsel %vm455, %v1601, %v1602
      %v1604 = vrot.slane %v1487, 1
      %v1605 = vsel %vm455, %v1602, %v1604
      %v1606 = vrot.slane %v1488, 1
      %v1607 = vrot.slane %v1489, 1
      %v1608 = vsel %vm455, %v1606, %v1607
      %v1609 = vrot.slane %v1490, 1
      %v1610 = vsel %vm455, %v1607, %v1609
      %v1611 = vrot.slane %v1491, 1
      %v1612 = vrot.slane %v1492, 1
      %v1613 = vsel %vm455, %v1611, %v1612
      %v1614 = vrot.slane %v1493, 1
      %v1615 = vsel %vm455, %v1612, %v1614
      %v1616 = vrot.slane %v1494, 1
      %v1617 = vrot.slane %v1495, 1
      %v1618 = vsel %vm455, %v1616, %v1617
      %v1619 = vrot.slane %v1496, 1
      %v1620 = vsel %vm455, %v1617, %v1619
      %v1621 = vrot.slane %v1497, 1
      %v1622 = vrot.slane %v1498, 1
      %v1623 = vsel %vm455, %v1621, %v1622
      %v1624 = vrot.slane %v1499, 1
      %v1625 = vsel %vm455, %v1622, %v1624
      %v1626 = vrot.slane %v1500, 1
      %v1627 = vrot.slane %v1501, 1
      %v1628 = vsel %vm455, %v1626, %v1627
      %v1629 = vrot.slane %v1502, 1
      %v1630 = vsel %vm455, %v1627, %v1629
      %v1663 = vadd.f32 %v1422, %v1553
      %v1664 = vadd.f32 %v1423, %v1555
      %v1665 = vadd.f32 %v1424, %v1558
      %v1666 = vadd.f32 %v1425, %v1560
      %v1667 = vadd.f32 %v1426, %v1563
      %v1668 = vadd.f32 %v1427, %v1565
      %v1669 = vadd.f32 %v1428, %v1568
      %v1670 = vadd.f32 %v1429, %v1570
      %v1671 = vadd.f32 %v1430, %v1573
      %v1672 = vadd.f32 %v1431, %v1575
      %v1673 = vadd.f32 %v1432, %v1578
      %v1674 = vadd.f32 %v1433, %v1580
      %v1675 = vadd.f32 %v1434, %v1583
      %v1676 = vadd.f32 %v1435, %v1585
      %v1677 = vadd.f32 %v1436, %v1588
      %v1678 = vadd.f32 %v1437, %v1590
      %v1679 = vadd.f32 %v1438, %v1593
      %v1680 = vadd.f32 %v1439, %v1595
      %v1681 = vadd.f32 %v1440, %v1598
      %v1682 = vadd.f32 %v1441, %v1600
      %v1683 = vadd.f32 %v1442, %v1603
      %v1684 = vadd.f32 %v1443, %v1605
      %v1685 = vadd.f32 %v1444, %v1608
      %v1686 = vadd.f32 %v1445, %v1610
      %v1687 = vadd.f32 %v1446, %v1613
      %v1688 = vadd.f32 %v1447, %v1615
      %v1689 = vadd.f32 %v1448, %v1618
      %v1690 = vadd.f32 %v1449, %v1620
      %v1691 = vadd.f32 %v1450, %v1623
      %v1692 = vadd.f32 %v1451, %v1625
      %v1693 = vadd.f32 %v1452, %v1628
      %v1694 = vadd.f32 %v1453, %v1630
      %v1695 = vperm.slane %v288, 0
      %v1696 = vmul.f32 %v239, %v1695
      %v1697 = vmul.f32 %v240, %v1695
      %v1698 = vmul.f32 %v241, %v1695
      %v1699 = vmul.f32 %v242, %v1695
      %v1700 = vmul.f32 %v243, %v1695
      %v1701 = vmul.f32 %v244, %v1695
      %v1702 = vmul.f32 %v245, %v1695
      %v1703 = vmul.f32 %v246, %v1695
      %v1704 = vmul.f32 %v247, %v1695
      %v1705 = vmul.f32 %v248, %v1695
      %v1706 = vmul.f32 %v249, %v1695
      %v1707 = vmul.f32 %v250, %v1695
      %v1708 = vmul.f32 %v251, %v1695
      %v1709 = vmul.f32 %v252, %v1695
      %v1710 = vmul.f32 %v253, %v1695
      %v1711 = vmul.f32 %v254, %v1695
      %v1712 = vmul.f32 %v255, %v1695
      %v1713 = vmul.f32 %v256, %v1695
      %v1714 = vmul.f32 %v257, %v1695
      %v1715 = vmul.f32 %v258, %v1695
      %v1716 = vmul.f32 %v259, %v1695
      %v1717 = vmul.f32 %v260, %v1695
      %v1718 = vmul.f32 %v261, %v1695
      %v1719 = vmul.f32 %v262, %v1695
      %v1720 = vmul.f32 %v263, %v1695
      %v1721 = vmul.f32 %v264, %v1695
      %v1722 = vmul.f32 %v265, %v1695
      %v1723 = vmul.f32 %v266, %v1695
      %v1724 = vmul.f32 %v267, %v1695
      %v1725 = vmul.f32 %v268, %v1695
      %v1726 = vmul.f32 %v269, %v1695
      %v1727 = vmul.f32 %v270, %v1695
      %v1728 = vmul.f32 %v271, %v1695
      %v1729 = vmul.f32 %v272, %v1695
      %v1730 = vmul.f32 %v273, %v1695
      %v1731 = vmul.f32 %v274, %v1695
      %v1732 = vmul.f32 %v275, %v1695
      %v1733 = vmul.f32 %v276, %v1695
      %v1734 = vmul.f32 %v277, %v1695
      %v1735 = vmul.f32 %v278, %v1695
      %v1736 = vmul.f32 %v279, %v1695
      %v1737 = vmul.f32 %v280, %v1695
      %v1738 = vmul.f32 %v281, %v1695
      %v1739 = vmul.f32 %v282, %v1695
      %v1740 = vmul.f32 %v283, %v1695
      %v1741 = vmul.f32 %v284, %v1695
      %v1742 = vmul.f32 %v285, %v1695
      %v1743 = vmul.f32 %v286, %v1695
      %v1792 = vrot.slane %v1696, 2
      %v1793 = vrot.slane %v1697, 2
      %v1794 = vsel %vm697, %v1792, %v1793
      %v1795 = vrot.slane %v1698, 2
      %v1796 = vsel %vm697, %v1793, %v1795
      %v1797 = vrot.slane %v1699, 2
      %v1798 = vrot.slane %v1700, 2
      %v1799 = vsel %vm697, %v1797, %v1798
      %v1800 = vrot.slane %v1701, 2
      %v1801 = vsel %vm697, %v1798, %v1800
      %v1802 = vrot.slane %v1702, 2
      %v1803 = vrot.slane %v1703, 2
      %v1804 = vsel %vm697, %v1802, %v1803
      %v1805 = vrot.slane %v1704, 2
      %v1806 = vsel %vm697, %v1803, %v1805
      %v1807 = vrot.slane %v1705, 2
      %v1808 = vrot.slane %v1706, 2
      %v1809 = vsel %vm697, %v1807, %v1808
      %v1810 = vrot.slane %v1707, 2
      %v1811 = vsel %vm697, %v1808, %v1810
      %v1812 = vrot.slane %v1708, 2
      %v1813 = vrot.slane %v1709, 2
      %v1814 = vsel %vm697, %v1812, %v1813
      %v1815 = vrot.slane %v1710, 2
      %v1816 = vsel %vm697, %v1813, %v1815
      %v1817 = vrot.slane %v1711, 2
      %v1818 = vrot.slane %v1712, 2
      %v1819 = vsel %vm697, %v1817, %v1818
      %v1820 = vrot.slane %v1713, 2
      %v1821 = vsel %vm697, %v1818, %v1820
      %v1822 = vrot.slane %v1714, 2
      %v1823 = vrot.slane %v1715, 2
      %v1824 = vsel %vm697, %v1822, %v1823
      %v1825 = vrot.slane %v1716, 2
      %v1826 = vsel %vm697, %v1823, %v1825
      %v1827 = vrot.slane %v1717, 2
      %v1828 = vrot.slane %v1718, 2
      %v1829 = vsel %vm697, %v1827, %v1828
      %v1830 = vrot.slane %v1719, 2
      %v1831 = vsel %vm697, %v1828, %v1830
      %v1832 = vrot.slane %v1720, 2
      %v1833 = vrot.slane %v1721, 2
      %v1834 = vsel %vm697, %v1832, %v1833
      %v1835 = vrot.slane %v1722, 2
      %v1836 = vsel %vm697, %v1833, %v1835
      %v1837 = vrot.slane %v1723, 2
      %v1838 = vrot.slane %v1724, 2
      %v1839 = vsel %vm697, %v1837, %v1838
      %v1840 = vrot.slane %v1725, 2
      %v1841 = vsel %vm697, %v1838, %v1840
      %v1842 = vrot.slane %v1726, 2
      %v1843 = vrot.slane %v1727, 2
      %v1844 = vsel %vm697, %v1842, %v1843
      %v1845 = vrot.slane %v1728, 2
      %v1846 = vsel %vm697, %v1843, %v1845
      %v1847 = vrot.slane %v1729, 2
      %v1848 = vrot.slane %v1730, 2
      %v1849 = vsel %vm697, %v1847, %v1848
      %v1850 = vrot.slane %v1731, 2
      %v1851 = vsel %vm697, %v1848, %v1850
      %v1852 = vrot.slane %v1732, 2
      %v1853 = vrot.slane %v1733, 2
      %v1854 = vsel %vm697, %v1852, %v1853
      %v1855 = vrot.slane %v1734, 2
      %v1856 = vsel %vm697, %v1853, %v1855
      %v1857 = vrot.slane %v1735, 2
      %v1858 = vrot.slane %v1736, 2
      %v1859 = vsel %vm697, %v1857, %v1858
      %v1860 = vrot.slane %v1737, 2
      %v1861 = vsel %vm697, %v1858, %v1860
      %v1862 = vrot.slane %v1738, 2
      %v1863 = vrot.slane %v1739, 2
      %v1864 = vsel %vm697, %v1862, %v1863
      %v1865 = vrot.slane %v1740, 2
      %v1866 = vsel %vm697, %v1863, %v1865
      %v1867 = vrot.slane %v1741, 2
      %v1868 = vrot.slane %v1742, 2
      %v1869 = vsel %vm697, %v1867, %v1868
      %v1870 = vrot.slane %v1743, 2
      %v1871 = vsel %vm697, %v1868, %v1870
      %v1904 = vadd.f32 %v1663, %v1794
      %v1905 = vadd.f32 %v1664, %v1796
      %v1906 = vadd.f32 %v1665, %v1799
      %v1907 = vadd.f32 %v1666, %v1801
      %v1908 = vadd.f32 %v1667, %v1804
      %v1909 = vadd.f32 %v1668, %v1806
      %v1910 = vadd.f32 %v1669, %v1809
      %v1911 = vadd.f32 %v1670, %v1811
      %v1912 = vadd.f32 %v1671, %v1814
      %v1913 = vadd.f32 %v1672, %v1816
      %v1914 = vadd.f32 %v1673, %v1819
      %v1915 = vadd.f32 %v1674, %v1821
      %v1916 = vadd.f32 %v1675, %v1824
      %v1917 = vadd.f32 %v1676, %v1826
      %v1918 = vadd.f32 %v1677, %v1829
      %v1919 = vadd.f32 %v1678, %v1831
      %v1920 = vadd.f32 %v1679, %v1834
      %v1921 = vadd.f32 %v1680, %v1836
      %v1922 = vadd.f32 %v1681, %v1839
      %v1923 = vadd.f32 %v1682, %v1841
      %v1924 = vadd.f32 %v1683, %v1844
      %v1925 = vadd.f32 %v1684, %v1846
      %v1926 = vadd.f32 %v1685, %v1849
      %v1927 = vadd.f32 %v1686, %v1851
      %v1928 = vadd.f32 %v1687, %v1854
      %v1929 = vadd.f32 %v1688, %v1856
      %v1930 = vadd.f32 %v1689, %v1859
      %v1931 = vadd.f32 %v1690, %v1861
      %v1932 = vadd.f32 %v1691, %v1864
      %v1933 = vadd.f32 %v1692, %v1866
      %v1934 = vadd.f32 %v1693, %v1869
      %v1935 = vadd.f32 %v1694, %v1871
      %vm1936 = vcmask 31744
      %1937 = vst.msk [vmem:[%s232] sm:$0xff] %vm1936, %v1904
      %1938 = vst.msk [vmem:[%s232 + $0x8] sm:$0xff] %vm1936, %v1905
      %1939 = vst.msk [vmem:[%s232 + $0x10] sm:$0xff] %vm1936, %v1906
      %1940 = vst.msk [vmem:[%s232 + $0x18] sm:$0xff] %vm1936, %v1907
      %1941 = vst.msk [vmem:[%s232 + $0x20] sm:$0xff] %vm1936, %v1908
      %1942 = vst.msk [vmem:[%s232 + $0x28] sm:$0xff] %vm1936, %v1909
      %1943 = vst.msk [vmem:[%s232 + $0x30] sm:$0xff] %vm1936, %v1910
      %1944 = vst.msk [vmem:[%s232 + $0x38] sm:$0xff] %vm1936, %v1911
      %1945 = vst.msk [vmem:[%s232 + $0x40] sm:$0xff] %vm1936, %v1912
      %1946 = vst.msk [vmem:[%s232 + $0x48] sm:$0xff] %vm1936, %v1913
      %1947 = vst.msk [vmem:[%s232 + $0x50] sm:$0xff] %vm1936, %v1914
      %1948 = vst.msk [vmem:[%s232 + $0x58] sm:$0xff] %vm1936, %v1915
      %1949 = vst.msk [vmem:[%s232 + $0x60] sm:$0xff] %vm1936, %v1916
      %1950 = vst.msk [vmem:[%s232 + $0x68] sm:$0xff] %vm1936, %v1917
      %1951 = vst.msk [vmem:[%s232 + $0x70] sm:$0xff] %vm1936, %v1918
      %1952 = vst.msk [vmem:[%s232 + $0x78] sm:$0xff] %vm1936, %v1919
      %1953 = vst.msk [vmem:[%s232 + $0x80] sm:$0xff] %vm1936, %v1920
      %1954 = vst.msk [vmem:[%s232 + $0x88] sm:$0xff] %vm1936, %v1921
      %1955 = vst.msk [vmem:[%s232 + $0x90] sm:$0xff] %vm1936, %v1922
      %1956 = vst.msk [vmem:[%s232 + $0x98] sm:$0xff] %vm1936, %v1923
      %1957 = vst.msk [vmem:[%s232 + $0xa0] sm:$0xff] %vm1936, %v1924
      %1958 = vst.msk [vmem:[%s232 + $0xa8] sm:$0xff] %vm1936, %v1925
      %1959 = vst.msk [vmem:[%s232 + $0xb0] sm:$0xff] %vm1936, %v1926
      %1960 = vst.msk [vmem:[%s232 + $0xb8] sm:$0xff] %vm1936, %v1927
      %1961 = vst.msk [vmem:[%s232 + $0xc0] sm:$0xff] %vm1936, %v1928
      %1962 = vst.msk [vmem:[%s232 + $0xc8] sm:$0xff] %vm1936, %v1929
      %1963 = vst.msk [vmem:[%s232 + $0xd0] sm:$0xff] %vm1936, %v1930
      %1964 = vst.msk [vmem:[%s232 + $0xd8] sm:$0xff] %vm1936, %v1931
      %1965 = vst.msk [vmem:[%s232 + $0xe0] sm:$0xff] %vm1936, %v1932
      %1966 = vst.msk [vmem:[%s232 + $0xe8] sm:$0xff] %vm1936, %v1933
      %1967 = vst.msk [vmem:[%s232 + $0xf0] sm:$0xff] %vm1936, %v1934
      %1968 = vst.msk [vmem:[%s232 + $0xf8] sm:$0xff] %vm1936, %v1935
      %p1969 = scmp.lt.s32.totalorder %s18, 1
      %s1970 = scalar_select %p1969, %s18, 1
      %p1971 = scmp.lt.s32.totalorder %s19, 0
      %s1972 = scalar_select %p1971, %s19, 0
      %s1973 = smul.addr %s1970, 32
      %s1974 = sadd.s32 %s1972, %s1973
      %s1975 = smul.addr %s1974, 8
      %s1976 = scalar_lea.vmem %s3, %s1975
      // Predicated region
      $region33: #{depthwise_conv_forward.1} parent=31 // pred_check
        %p1977 = pneg %p126
      $region34: #{depthwise_conv_forward.1} parent=31 // pred_check_branch
        %1979 = sbr.rel (%p1977) target = $region36
      $region35: #{depthwise_conv_forward.1} parent=31 // pred_region
        _
      $region36: #{depthwise_conv_forward.1} parent=31 // pred_fallthru
        _
    $region32: #{depthwise_conv_forward.1} parent=5 // pred_fallthru
      _
    %p1980 = scmp.le.s32.totalorder 2, %s9
    // Predicated region
    $region37: #{depthwise_conv_forward.1} parent=5 // pred_check
      %p1981 = pneg %p1980
    $region38: #{depthwise_conv_forward.1} parent=5 // pred_check_branch
      %1983 = sbr.rel (%p1981) target = $region40
    $region39: #{depthwise_conv_forward.1} parent=5 // pred_region
      %s1984 = ssub.s32 %s9, 2
      // Predicated region
      $region41: #{depthwise_conv_forward.1} parent=39 // pred_check
        %p1985 = pneg %p132
      $region42: #{depthwise_conv_forward.1} parent=39 // pred_check_branch
        %1987 = sbr.rel (%p1985) target = $region44
      $region43: #{depthwise_conv_forward.1} parent=39 // pred_region
        %p1988 = scmp.lt.s32.totalorder %s20, 1
        %s1989 = scalar_select %p1988, %s20, 1
        %p1990 = scmp.lt.s32.totalorder %s21, 0
        %s1991 = scalar_select %p1990, %s21, 0
        %s1992 = smul.addr %s1989, 32
        %s1993 = sadd.s32 %s1991, %s1992
        %s1994 = smul.addr %s1993, 8
        %s1995 = scalar_lea.vmem %s3, %s1994
      $region44: #{depthwise_conv_forward.1} parent=39 // pred_fallthru
        _
    $region40: #{depthwise_conv_forward.1} parent=5 // pred_fallthru
      _
  $region6: #{depthwise_conv_forward.1} parent=0 // loop_footer
    %s13 = sadd.s32 1, %s9
  $region7: #{depthwise_conv_forward.1} parent=0 // loop_footer_branch
    %8 = sbr.rel target = $region3
  $region8: #{depthwise_conv_forward.1} parent=0 // loop_exit
    _

</llo_original>
